<compile_context>
chip_gen: v5e
topology: v5e:2x2
jax: 0.10.0
libtpu: 0.0.40
codegen_flags: <defaults>
</compile_context>

<pallas_src>
import jax
import jax.numpy as jnp
from jax import lax
from jax.experimental import pallas as pl
from jax.experimental.pallas import tpu as pltpu


# ---------------------------------------------------------------------------
# Generic tiled matmul-with-bias kernel (parallel grid):  C = A @ B + bias
# Used for the two recurrence-independent matmuls (input proj, vocab proj).
# ---------------------------------------------------------------------------
def _matmul_bias_kernel(a_ref, b_ref, bias_ref, o_ref, acc_ref):
    @pl.when(pl.program_id(2) == 0)
    def _():
        acc_ref[...] = jnp.zeros_like(acc_ref)

    acc_ref[...] += jnp.dot(a_ref[...], b_ref[...],
                            preferred_element_type=jnp.float32)

    @pl.when(pl.program_id(2) == pl.num_programs(2) - 1)
    def _():
        o_ref[...] = (acc_ref[...] + bias_ref[...]).astype(o_ref.dtype)


def _pick_tile(dim, candidates):
    for c in candidates:
        if c <= dim and dim % c == 0:
            return c
    return dim  # fall back to the full (untiled) dimension


def matmul_bias(a, b, bias, *, out_dtype=jnp.float32):
    """a: (M, K), b: (K, N), bias: (N,) -> (M, N); f32 accumulation on MXU."""
    M, K = a.shape
    K2, N = b.shape
    assert K == K2
    tm = _pick_tile(M, (256, 128, 64, 32, 16, 8))
    tn = _pick_tile(N, (256, 128))
    tk = _pick_tile(K, (512, 256, 128))
    bias2 = bias.reshape(1, N).astype(jnp.float32)
    return pl.pallas_call(
        _matmul_bias_kernel,
        out_shape=jax.ShapeDtypeStruct((M, N), out_dtype),
        grid_spec=pltpu.PrefetchScalarGridSpec(
            num_scalar_prefetch=0,
            grid=(M // tm, N // tn, K // tk),
            in_specs=[
                pl.BlockSpec((tm, tk), lambda i, j, k: (i, k)),
                pl.BlockSpec((tk, tn), lambda i, j, k: (k, j)),
                pl.BlockSpec((1, tn), lambda i, j, k: (0, j)),
            ],
            out_specs=pl.BlockSpec((tm, tn), lambda i, j, k: (i, j)),
            scratch_shapes=[pltpu.VMEM((tm, tn), jnp.float32)],
        ),
        compiler_params=pltpu.CompilerParams(
            dimension_semantics=("parallel", "parallel", "arbitrary")),
    )(a, b, bias2)


# ---------------------------------------------------------------------------
# GRU recurrence kernel: all T steps inside one grid invocation.
# ---------------------------------------------------------------------------
def _gru_recurrence_kernel(gi_ref, w_hh_ref, b_hh_ref, hs_ref, h_scratch):
    """gi_ref:   (T, B, 3H) f32  precomputed x @ W_ih + b_ih, time-major,
                 PyTorch gate order [r | z | n], each gate lane-aligned.
       w_hh_ref: (H, 3H) bf16    hidden->hidden weights (transposed).
       b_hh_ref: (1, 3H) f32
       hs_ref:   (T, B, H) f32   output hidden states.
       h_scratch:(B, H)  f32     hidden carry (stays in VMEM/vregs)."""
    T = gi_ref.shape[0]
    H = h_scratch.shape[1]

    h_scratch[...] = jnp.zeros_like(h_scratch)
    b_hh = b_hh_ref[...]
    w_hh = w_hh_ref[...]

    def step(t, carry):
        h = h_scratch[...]                                   # (B, H) f32
        gi = gi_ref[t]                                       # (B, 3H) f32
        gh = jnp.dot(h.astype(w_hh.dtype), w_hh,
                     preferred_element_type=jnp.float32) + b_hh
        # H is a multiple of 128, so gate slices are vreg/lane aligned.
        r = jax.nn.sigmoid(gi[:, 0 * H:1 * H] + gh[:, 0 * H:1 * H])
        z = jax.nn.sigmoid(gi[:, 1 * H:2 * H] + gh[:, 1 * H:2 * H])
        n = jnp.tanh(gi[:, 2 * H:3 * H] + r * gh[:, 2 * H:3 * H])
        h_new = (1.0 - z) * n + z * h
        h_scratch[...] = h_new
        hs_ref[t] = h_new
        return carry

    lax.fori_loop(0, T, step, 0, unroll=True)


def run_gru_recurrence(gi_tbg, w_hh, b_hh):
    """gi_tbg: (T, B, 3H) f32, w_hh: (H, 3H) bf16, b_hh: (3H,) f32 -> (T,B,H)."""
    T, B, G = gi_tbg.shape
    H = w_hh.shape[0]
    assert G == 3 * H
    return pl.pallas_call(
        _gru_recurrence_kernel,
        out_shape=jax.ShapeDtypeStruct((T, B, H), jnp.float32),
        grid_spec=pltpu.PrefetchScalarGridSpec(
            num_scalar_prefetch=0,
            grid=(1,),
            in_specs=[
                pl.BlockSpec((T, B, G), lambda i: (0, 0, 0)),
                pl.BlockSpec((H, G), lambda i: (0, 0)),
                pl.BlockSpec((1, G), lambda i: (0, 0)),
            ],
            out_specs=pl.BlockSpec((T, B, H), lambda i: (0, 0, 0)),
            scratch_shapes=[pltpu.VMEM((B, H), jnp.float32)],
        ),
        compiler_params=pltpu.CompilerParams(
            dimension_semantics=("arbitrary",)),  # recurrence is serial
    )(gi_tbg, w_hh, b_hh.reshape(1, G))


# ---------------------------------------------------------------------------
# Padding helpers (B -> multiple of 8 sublanes, H/V -> multiple of 128 lanes).
# ---------------------------------------------------------------------------
def _round_up(x, m):
    return ((x + m - 1) // m) * m


def _pad_axis(x, axis, new_size):
    pad = new_size - x.shape[axis]
    if pad == 0:
        return x
    widths = [(0, 0)] * x.ndim
    widths[axis] = (0, pad)
    return jnp.pad(x, widths)


def _pad_gate_cols(w, H, Hp):
    """Pad a gate-concatenated last axis 3H -> 3Hp keeping [r|z|n] aligned."""
    lead = w.shape[:-1]
    w3 = w.reshape(lead + (3, H))
    w3 = _pad_axis(w3, w3.ndim - 1, Hp)
    return w3.reshape(lead + (3 * Hp,))


# ---------------------------------------------------------------------------
# Forward pass (matches DecoderRNN.forward).
# ---------------------------------------------------------------------------
def decoder_rnn_forward(features, captions, params):
    """features: (B, E) f32, captions: (B, S) int32 -> logits (B, S, V) f32."""
    B, E = features.shape
    S = captions.shape[1]
    H = params["w_hh"].shape[0]
    V = params["w_out"].shape[1]
    T = S

    # embedding lookup + concat(features, caption_embeds): plain-JAX glue
    cap = captions[:, :-1]                                     # (B, S-1)
    cap_emb = jnp.take(params["embedding"], cap, axis=0)       # (B, S-1, E)
    x = jnp.concatenate([features[:, None, :], cap_emb], 1)    # (B, T, E)

    Bp = _round_up(B, 8)
    Hp = _round_up(H, 128)
    Vp = _round_up(V, 128)

    # pad weights (bf16 operands for the MXU, f32 biases / accumulation)
    w_ih = _pad_gate_cols(params["w_ih"], H, Hp).astype(jnp.bfloat16)        # (E, 3Hp)
    w_hh = _pad_axis(_pad_gate_cols(params["w_hh"], H, Hp), 0, Hp)
    w_hh = w_hh.astype(jnp.bfloat16)                                          # (Hp, 3Hp)
    b_ih = _pad_gate_cols(params["b_ih"], H, Hp).astype(jnp.float32)          # (3Hp,)
    b_hh = _pad_gate_cols(params["b_hh"], H, Hp).astype(jnp.float32)          # (3Hp,)
    w_out = _pad_axis(_pad_axis(params["w_out"], 0, Hp), 1, Vp)
    w_out = w_out.astype(jnp.bfloat16)                                        # (Hp, Vp)
    b_out = _pad_axis(params["b_out"], 0, Vp).astype(jnp.float32)             # (Vp,)

    x_p = _pad_axis(x, 0, Bp)                                                 # (Bp, T, E)

    # 1) hoisted input->hidden matmul (parallel grid, b_ih folded in)
    x_tm = jnp.transpose(x_p, (1, 0, 2)).reshape(T * Bp, E).astype(jnp.bfloat16)
    gi = matmul_bias(x_tm, w_ih, b_ih).reshape(T, Bp, 3 * Hp)                 # f32

    # 2) serial GRU recurrence: one kernel invocation, fori_loop over time
    hs = run_gru_recurrence(gi, w_hh, b_hh)                                   # (T, Bp, Hp)

    # 3) hoisted hidden->vocab projection (parallel grid, b_out folded in)
    hs_bm = jnp.transpose(hs, (1, 0, 2)).reshape(Bp * T, Hp).astype(jnp.bfloat16)
    logits = matmul_bias(hs_bm, w_out, b_out).reshape(Bp, T, Vp)

    return logits[:B, :, :V]                                                  # (B, S, V)


# ---------------------------------------------------------------------------
# Pure-JAX f32 reference (lax.scan GRU) for correctness checking.
# ---------------------------------------------------------------------------
def decoder_rnn_reference(features, captions, params):
    cap = captions[:, :-1]
    cap_emb = jnp.take(params["embedding"], cap, axis=0)
    x = jnp.concatenate([features[:, None, :], cap_emb], 1)
    x_t = jnp.transpose(x, (1, 0, 2))
    H = params["w_hh"].shape[0]

    def step(h, xt):
        gi = xt @ params["w_ih"] + params["b_ih"]
        gh = h @ params["w_hh"] + params["b_hh"]
        r = jax.nn.sigmoid(gi[:, :H] + gh[:, :H])
        z = jax.nn.sigmoid(gi[:, H:2 * H] + gh[:, H:2 * H])
        n = jnp.tanh(gi[:, 2 * H:] + r * gh[:, 2 * H:])
        h_new = (1.0 - z) * n + z * h
        return h_new, h_new

    h0 = jnp.zeros((x_t.shape[1], H), jnp.float32)
    _, hs = lax.scan(step, h0, x_t)
    logits_t = hs @ params["w_out"] + params["b_out"]
    return jnp.transpose(logits_t, (1, 0, 2))


def make_params(key, embed_size, hidden_size, vocab_size):
    ks = jax.random.split(key, 7)
    s = 1.0 / jnp.sqrt(hidden_size)
    return {
        "embedding": jax.random.normal(ks[0], (vocab_size, embed_size), jnp.float32),
        # stored transposed relative to PyTorch: (in, 3H) so x @ W works directly
        "w_ih": jax.random.uniform(ks[1], (embed_size, 3 * hidden_size), jnp.float32, -s, s),
        "w_hh": jax.random.uniform(ks[2], (hidden_size, 3 * hidden_size), jnp.float32, -s, s),
        "b_ih": jax.random.uniform(ks[3], (3 * hidden_size,), jnp.float32, -s, s),
        "b_hh": jax.random.uniform(ks[4], (3 * hidden_size,), jnp.float32, -s, s),
        "w_out": jax.random.uniform(ks[5], (hidden_size, vocab_size), jnp.float32, -s, s),
        "b_out": jax.random.uniform(ks[6], (vocab_size,), jnp.float32, -s, s),
    }


if __name__ == "__main__":
    # TODO(synk): `sample` (greedy decode loop with host-side .item()) is
    # host-side control flow and is not implemented as a kernel; only `forward`.
    embed_size, hidden_size, vocab_size = 32, 32, 64
    batch, seq = 2, 8

    key = jax.random.PRNGKey(0)
    k_par, k_feat, k_cap = jax.random.split(key, 3)
    params = make_params(k_par, embed_size, hidden_size, vocab_size)
    features = jax.random.normal(k_feat, (batch, embed_size), jnp.float32)
    captions = jax.random.randint(k_cap, (batch, seq), 0, vocab_size, jnp.int32)

    fwd = jax.jit(decoder_rnn_forward)
    out = jax.block_until_ready(fwd(features, captions, params))

    ref = decoder_rnn_reference(features, captions, params)
    assert out.shape == (batch, seq, vocab_size)
    # bf16 MXU operands with f32 accumulation -> looser tolerance than pure f32
    assert jnp.allclose(out, ref, atol=5e-2, rtol=5e-2), \
        float(jnp.max(jnp.abs(out - ref)))
    print("KERNEL_OK")
</pallas_src>

<mosaic_0001>
module attributes {stable_mosaic.version = 11 : i64} {
  func.func @_gru_recurrence_kernel(%arg0: i32, %arg1: memref<8x8x384xf32, #tpu.memory_space<vmem>>, %arg2: memref<128x384xbf16, #tpu.memory_space<vmem>>, %arg3: memref<1x384xf32, #tpu.memory_space<vmem>>, %arg4: memref<8x8x128xf32, #tpu.memory_space<vmem>>, %arg5: memref<8x128xf32, #tpu.memory_space<vmem>>) attributes {dimension_semantics = [#tpu.dimension_semantics<arbitrary>], iteration_bounds = array<i64: 1>, scalar_prefetch = 0 : i64, scratch_operands = 1 : i64, tpu.core_type = #tpu.core_type<tc>, window_params = [{pipeline_mode = #tpu.pipeline_mode<synchronous>, transform_indices = @transform_0, window_bounds = array<i64: 8, 8, 384>}, {pipeline_mode = #tpu.pipeline_mode<synchronous>, transform_indices = @transform_1, window_bounds = array<i64: 128, 384>}, {pipeline_mode = #tpu.pipeline_mode<synchronous>, transform_indices = @transform_2, window_bounds = array<i64: 1, 384>}, {pipeline_mode = #tpu.pipeline_mode<synchronous>, transform_indices = @transform_3, window_bounds = array<i64: 8, 8, 128>}]} {
    %cst = arith.constant 0.000000e+00 : f32
    %0 = vector.broadcast %cst : f32 to vector<8x128xf32>
    %c0 = arith.constant 0 : index
    %c0_0 = arith.constant 0 : index
    %1 = vector.load %arg5[%c0, %c0_0] : memref<8x128xf32, #tpu.memory_space<vmem>>, vector<8x128xf32>
    tpu.vector_store %arg5[%c0, %c0_0], %0 {strides = array<i32>} : memref<8x128xf32, #tpu.memory_space<vmem>>, vector<8x128xf32>,
    %c0_1 = arith.constant 0 : index
    %c0_2 = arith.constant 0 : index
    %2 = vector.load %arg3[%c0_1, %c0_2] : memref<1x384xf32, #tpu.memory_space<vmem>>, vector<1x384xf32>
    %c0_3 = arith.constant 0 : index
    %c0_4 = arith.constant 0 : index
    %3 = vector.load %arg2[%c0_3, %c0_4] : memref<128x384xbf16, #tpu.memory_space<vmem>>, vector<128x384xbf16>
    %c0_i32 = arith.constant 0 : i32
    %c0_5 = arith.constant 0 : index
    %c0_6 = arith.constant 0 : index
    %4 = vector.load %arg5[%c0_5, %c0_6] : memref<8x128xf32, #tpu.memory_space<vmem>>, vector<8x128xf32>
    %5 = arith.index_cast %c0_i32 : i32 to index
    %c0_7 = arith.constant 0 : index
    %c0_8 = arith.constant 0 : index
    %6 = vector.load %arg1[%5, %c0_7, %c0_8] : memref<8x8x384xf32, #tpu.memory_space<vmem>>, vector<1x8x384xf32>
    %7 = vector.shape_cast %6 : vector<1x8x384xf32> to vector<8x384xf32>
    %8 = arith.truncf %4 : vector<8x128xf32> to vector<8x128xbf16>
    %cst_9 = arith.constant dense<0.000000e+00> : vector<8x384xf32>
    %9 = tpu.matmul %8, %3, %cst_9 {dimension_numbers = #tpu.dot_dimension_numbers<[1], [0], [0], [1], [0, 0, 1, 1], [], []>} : vector<8x128xbf16>, vector<128x384xbf16>, vector<8x384xf32> -> vector<8x384xf32>
    %10 = vector.broadcast %2 : vector<1x384xf32> to vector<8x384xf32>
    %11 = arith.addf %9, %10 : vector<8x384xf32>
    %12 = vector.extract_strided_slice %7 {offsets = [0, 0], sizes = [8, 128], strides = [1, 1]} : vector<8x384xf32> to vector<8x128xf32>
    %13 = vector.extract_strided_slice %11 {offsets = [0, 0], sizes = [8, 128], strides = [1, 1]} : vector<8x384xf32> to vector<8x128xf32>
    %14 = arith.addf %12, %13 : vector<8x128xf32>
    %15 = arith.negf %14 : vector<8x128xf32>
    %16 = math.exp %15 : vector<8x128xf32>
    %cst_10 = arith.constant 1.000000e+00 : f32
    %17 = vector.broadcast %cst_10 : f32 to vector<8x128xf32>
    %18 = arith.addf %17, %16 : vector<8x128xf32>
    %19 = arith.divf %17, %18 : vector<8x128xf32>
    %20 = vector.extract_strided_slice %7 {offsets = [0, 128], sizes = [8, 128], strides = [1, 1]} : vector<8x384xf32> to vector<8x128xf32>
    %21 = vector.extract_strided_slice %11 {offsets = [0, 128], sizes = [8, 128], strides = [1, 1]} : vector<8x384xf32> to vector<8x128xf32>
    %22 = arith.addf %20, %21 : vector<8x128xf32>
    %23 = arith.negf %22 : vector<8x128xf32>
    %24 = math.exp %23 : vector<8x128xf32>
    %cst_11 = arith.constant 1.000000e+00 : f32
    %25 = vector.broadcast %cst_11 : f32 to vector<8x128xf32>
    %26 = arith.addf %25, %24 : vector<8x128xf32>
    %27 = arith.divf %25, %26 : vector<8x128xf32>
    %28 = vector.extract_strided_slice %7 {offsets = [0, 256], sizes = [8, 128], strides = [1, 1]} : vector<8x384xf32> to vector<8x128xf32>
    %29 = vector.extract_strided_slice %11 {offsets = [0, 256], sizes = [8, 128], strides = [1, 1]} : vector<8x384xf32> to vector<8x128xf32>
    %30 = arith.mulf %19, %29 : vector<8x128xf32>
    %31 = arith.addf %28, %30 : vector<8x128xf32>
    %32 = math.tanh %31 : vector<8x128xf32>
    %cst_12 = arith.constant 1.000000e+00 : f32
    %33 = vector.broadcast %cst_12 : f32 to vector<8x128xf32>
    %34 = arith.subf %33, %27 : vector<8x128xf32>
    %35 = arith.mulf %34, %32 : vector<8x128xf32>
    %36 = arith.mulf %27, %4 : vector<8x128xf32>
    %37 = arith.addf %35, %36 : vector<8x128xf32>
    %c0_13 = arith.constant 0 : index
    %c0_14 = arith.constant 0 : index
    %38 = vector.load %arg5[%c0_13, %c0_14] : memref<8x128xf32, #tpu.memory_space<vmem>>, vector<8x128xf32>
    tpu.vector_store %arg5[%c0_13, %c0_14], %37 {strides = array<i32>} : memref<8x128xf32, #tpu.memory_space<vmem>>, vector<8x128xf32>,
    %39 = arith.index_cast %c0_i32 : i32 to index
    %c0_15 = arith.constant 0 : index
    %c0_16 = arith.constant 0 : index
    %40 = vector.load %arg4[%39, %c0_15, %c0_16] : memref<8x8x128xf32, #tpu.memory_space<vmem>>, vector<1x8x128xf32>
    %41 = vector.shape_cast %40 : vector<1x8x128xf32> to vector<8x128xf32>
    %42 = vector.shape_cast %37 : vector<8x128xf32> to vector<1x8x128xf32>
    tpu.vector_store %arg4[%39, %c0_15, %c0_16], %42 {strides = array<i32>} : memref<8x8x128xf32, #tpu.memory_space<vmem>>, vector<1x8x128xf32>,
    %c1_i32 = arith.constant 1 : i32
    %c0_17 = arith.constant 0 : index
    %c0_18 = arith.constant 0 : index
    %43 = vector.load %arg5[%c0_17, %c0_18] : memref<8x128xf32, #tpu.memory_space<vmem>>, vector<8x128xf32>
    %44 = arith.index_cast %c1_i32 : i32 to index
    %c0_19 = arith.constant 0 : index
    %c0_20 = arith.constant 0 : index
    %45 = vector.load %arg1[%44, %c0_19, %c0_20] : memref<8x8x384xf32, #tpu.memory_space<vmem>>, vector<1x8x384xf32>
    %46 = vector.shape_cast %45 : vector<1x8x384xf32> to vector<8x384xf32>
    %47 = arith.truncf %43 : vector<8x128xf32> to vector<8x128xbf16>
    %cst_21 = arith.constant dense<0.000000e+00> : vector<8x384xf32>
    %48 = tpu.matmul %47, %3, %cst_21 {dimension_numbers = #tpu.dot_dimension_numbers<[1], [0], [0], [1], [0, 0, 1, 1], [], []>} : vector<8x128xbf16>, vector<128x384xbf16>, vector<8x384xf32> -> vector<8x384xf32>
    %49 = vector.broadcast %2 : vector<1x384xf32> to vector<8x384xf32>
    %50 = arith.addf %48, %49 : vector<8x384xf32>
    %51 = vector.extract_strided_slice %46 {offsets = [0, 0], sizes = [8, 128], strides = [1, 1]} : vector<8x384xf32> to vector<8x128xf32>
    %52 = vector.extract_strided_slice %50 {offsets = [0, 0], sizes = [8, 128], strides = [1, 1]} : vector<8x384xf32> to vector<8x128xf32>
    %53 = arith.addf %51, %52 : vector<8x128xf32>
    %54 = arith.negf %53 : vector<8x128xf32>
    %55 = math.exp %54 : vector<8x128xf32>
    %cst_22 = arith.constant 1.000000e+00 : f32
    %56 = vector.broadcast %cst_22 : f32 to vector<8x128xf32>
    %57 = arith.addf %56, %55 : vector<8x128xf32>
    %58 = arith.divf %56, %57 : vector<8x128xf32>
    %59 = vector.extract_strided_slice %46 {offsets = [0, 128], sizes = [8, 128], strides = [1, 1]} : vector<8x384xf32> to vector<8x128xf32>
    %60 = vector.extract_strided_slice %50 {offsets = [0, 128], sizes = [8, 128], strides = [1, 1]} : vector<8x384xf32> to vector<8x128xf32>
    %61 = arith.addf %59, %60 : vector<8x128xf32>
    %62 = arith.negf %61 : vector<8x128xf32>
    %63 = math.exp %62 : vector<8x128xf32>
    %cst_23 = arith.constant 1.000000e+00 : f32
    %64 = vector.broadcast %cst_23 : f32 to vector<8x128xf32>
    %65 = arith.addf %64, %63 : vector<8x128xf32>
    %66 = arith.divf %64, %65 : vector<8x128xf32>
    %67 = vector.extract_strided_slice %46 {offsets = [0, 256], sizes = [8, 128], strides = [1, 1]} : vector<8x384xf32> to vector<8x128xf32>
    %68 = vector.extract_strided_slice %50 {offsets = [0, 256], sizes = [8, 128], strides = [1, 1]} : vector<8x384xf32> to vector<8x128xf32>
    %69 = arith.mulf %58, %68 : vector<8x128xf32>
    %70 = arith.addf %67, %69 : vector<8x128xf32>
    %71 = math.tanh %70 : vector<8x128xf32>
    %cst_24 = arith.constant 1.000000e+00 : f32
    %72 = vector.broadcast %cst_24 : f32 to vector<8x128xf32>
    %73 = arith.subf %72, %66 : vector<8x128xf32>
    %74 = arith.mulf %73, %71 : vector<8x128xf32>
    %75 = arith.mulf %66, %43 : vector<8x128xf32>
    %76 = arith.addf %74, %75 : vector<8x128xf32>
    %c0_25 = arith.constant 0 : index
    %c0_26 = arith.constant 0 : index
    %77 = vector.load %arg5[%c0_25, %c0_26] : memref<8x128xf32, #tpu.memory_space<vmem>>, vector<8x128xf32>
    tpu.vector_store %arg5[%c0_25, %c0_26], %76 {strides = array<i32>} : memref<8x128xf32, #tpu.memory_space<vmem>>, vector<8x128xf32>,
    %78 = arith.index_cast %c1_i32 : i32 to index
    %c0_27 = arith.constant 0 : index
    %c0_28 = arith.constant 0 : index
    %79 = vector.load %arg4[%78, %c0_27, %c0_28] : memref<8x8x128xf32, #tpu.memory_space<vmem>>, vector<1x8x128xf32>
    %80 = vector.shape_cast %79 : vector<1x8x128xf32> to vector<8x128xf32>
    %81 = vector.shape_cast %76 : vector<8x128xf32> to vector<1x8x128xf32>
    tpu.vector_store %arg4[%78, %c0_27, %c0_28], %81 {strides = array<i32>} : memref<8x8x128xf32, #tpu.memory_space<vmem>>, vector<1x8x128xf32>,
    %c2_i32 = arith.constant 2 : i32
    %c0_29 = arith.constant 0 : index
    %c0_30 = arith.constant 0 : index
    %82 = vector.load %arg5[%c0_29, %c0_30] : memref<8x128xf32, #tpu.memory_space<vmem>>, vector<8x128xf32>
    %83 = arith.index_cast %c2_i32 : i32 to index
    %c0_31 = arith.constant 0 : index
    %c0_32 = arith.constant 0 : index
    %84 = vector.load %arg1[%83, %c0_31, %c0_32] : memref<8x8x384xf32, #tpu.memory_space<vmem>>, vector<1x8x384xf32>
    %85 = vector.shape_cast %84 : vector<1x8x384xf32> to vector<8x384xf32>
    %86 = arith.truncf %82 : vector<8x128xf32> to vector<8x128xbf16>
    %cst_33 = arith.constant dense<0.000000e+00> : vector<8x384xf32>
    %87 = tpu.matmul %86, %3, %cst_33 {dimension_numbers = #tpu.dot_dimension_numbers<[1], [0], [0], [1], [0, 0, 1, 1], [], []>} : vector<8x128xbf16>, vector<128x384xbf16>, vector<8x384xf32> -> vector<8x384xf32>
    %88 = vector.broadcast %2 : vector<1x384xf32> to vector<8x384xf32>
    %89 = arith.addf %87, %88 : vector<8x384xf32>
    %90 = vector.extract_strided_slice %85 {offsets = [0, 0], sizes = [8, 128], strides = [1, 1]} : vector<8x384xf32> to vector<8x128xf32>
    %91 = vector.extract_strided_slice %89 {offsets = [0, 0], sizes = [8, 128], strides = [1, 1]} : vector<8x384xf32> to vector<8x128xf32>
    %92 = arith.addf %90, %91 : vector<8x128xf32>
    %93 = arith.negf %92 : vector<8x128xf32>
    %94 = math.exp %93 : vector<8x128xf32>
    %cst_34 = arith.constant 1.000000e+00 : f32
    %95 = vector.broadcast %cst_34 : f32 to vector<8x128xf32>
    %96 = arith.addf %95, %94 : vector<8x128xf32>
    %97 = arith.divf %95, %96 : vector<8x128xf32>
    %98 = vector.extract_strided_slice %85 {offsets = [0, 128], sizes = [8, 128], strides = [1, 1]} : vector<8x384xf32> to vector<8x128xf32>
    %99 = vector.extract_strided_slice %89 {offsets = [0, 128], sizes = [8, 128], strides = [1, 1]} : vector<8x384xf32> to vector<8x128xf32>
    %100 = arith.addf %98, %99 : vector<8x128xf32>
    %101 = arith.negf %100 : vector<8x128xf32>
    %102 = math.exp %101 : vector<8x128xf32>
    %cst_35 = arith.constant 1.000000e+00 : f32
    %103 = vector.broadcast %cst_35 : f32 to vector<8x128xf32>
    %104 = arith.addf %103, %102 : vector<8x128xf32>
    %105 = arith.divf %103, %104 : vector<8x128xf32>
    %106 = vector.extract_strided_slice %85 {offsets = [0, 256], sizes = [8, 128], strides = [1, 1]} : vector<8x384xf32> to vector<8x128xf32>
    %107 = vector.extract_strided_slice %89 {offsets = [0, 256], sizes = [8, 128], strides = [1, 1]} : vector<8x384xf32> to vector<8x128xf32>
    %108 = arith.mulf %97, %107 : vector<8x128xf32>
    %109 = arith.addf %106, %108 : vector<8x128xf32>
    %110 = math.tanh %109 : vector<8x128xf32>
    %cst_36 = arith.constant 1.000000e+00 : f32
    %111 = vector.broadcast %cst_36 : f32 to vector<8x128xf32>
    %112 = arith.subf %111, %105 : vector<8x128xf32>
    %113 = arith.mulf %112, %110 : vector<8x128xf32>
    %114 = arith.mulf %105, %82 : vector<8x128xf32>
    %115 = arith.addf %113, %114 : vector<8x128xf32>
    %c0_37 = arith.constant 0 : index
    %c0_38 = arith.constant 0 : index
    %116 = vector.load %arg5[%c0_37, %c0_38] : memref<8x128xf32, #tpu.memory_space<vmem>>, vector<8x128xf32>
    tpu.vector_store %arg5[%c0_37, %c0_38], %115 {strides = array<i32>} : memref<8x128xf32, #tpu.memory_space<vmem>>, vector<8x128xf32>,
    %117 = arith.index_cast %c2_i32 : i32 to index
    %c0_39 = arith.constant 0 : index
    %c0_40 = arith.constant 0 : index
    %118 = vector.load %arg4[%117, %c0_39, %c0_40] : memref<8x8x128xf32, #tpu.memory_space<vmem>>, vector<1x8x128xf32>
    %119 = vector.shape_cast %118 : vector<1x8x128xf32> to vector<8x128xf32>
    %120 = vector.shape_cast %115 : vector<8x128xf32> to vector<1x8x128xf32>
    tpu.vector_store %arg4[%117, %c0_39, %c0_40], %120 {strides = array<i32>} : memref<8x8x128xf32, #tpu.memory_space<vmem>>, vector<1x8x128xf32>,
    %c3_i32 = arith.constant 3 : i32
    %c0_41 = arith.constant 0 : index
    %c0_42 = arith.constant 0 : index
    %121 = vector.load %arg5[%c0_41, %c0_42] : memref<8x128xf32, #tpu.memory_space<vmem>>, vector<8x128xf32>
    %122 = arith.index_cast %c3_i32 : i32 to index
    %c0_43 = arith.constant 0 : index
    %c0_44 = arith.constant 0 : index
    %123 = vector.load %arg1[%122, %c0_43, %c0_44] : memref<8x8x384xf32, #tpu.memory_space<vmem>>, vector<1x8x384xf32>
    %124 = vector.shape_cast %123 : vector<1x8x384xf32> to vector<8x384xf32>
    %125 = arith.truncf %121 : vector<8x128xf32> to vector<8x128xbf16>
    %cst_45 = arith.constant dense<0.000000e+00> : vector<8x384xf32>
    %126 = tpu.matmul %125, %3, %cst_45 {dimension_numbers = #tpu.dot_dimension_numbers<[1], [0], [0], [1], [0, 0, 1, 1], [], []>} : vector<8x128xbf16>, vector<128x384xbf16>, vector<8x384xf32> -> vector<8x384xf32>
    %127 = vector.broadcast %2 : vector<1x384xf32> to vector<8x384xf32>
    %128 = arith.addf %126, %127 : vector<8x384xf32>
    %129 = vector.extract_strided_slice %124 {offsets = [0, 0], sizes = [8, 128], strides = [1, 1]} : vector<8x384xf32> to vector<8x128xf32>
    %130 = vector.extract_strided_slice %128 {offsets = [0, 0], sizes = [8, 128], strides = [1, 1]} : vector<8x384xf32> to vector<8x128xf32>
    %131 = arith.addf %129, %130 : vector<8x128xf32>
    %132 = arith.negf %131 : vector<8x128xf32>
    %133 = math.exp %132 : vector<8x128xf32>
    %cst_46 = arith.constant 1.000000e+00 : f32
    %134 = vector.broadcast %cst_46 : f32 to vector<8x128xf32>
    %135 = arith.addf %134, %133 : vector<8x128xf32>
    %136 = arith.divf %134, %135 : vector<8x128xf32>
    %137 = vector.extract_strided_slice %124 {offsets = [0, 128], sizes = [8, 128], strides = [1, 1]} : vector<8x384xf32> to vector<8x128xf32>
    %138 = vector.extract_strided_slice %128 {offsets = [0, 128], sizes = [8, 128], strides = [1, 1]} : vector<8x384xf32> to vector<8x128xf32>
    %139 = arith.addf %137, %138 : vector<8x128xf32>
    %140 = arith.negf %139 : vector<8x128xf32>
    %141 = math.exp %140 : vector<8x128xf32>
    %cst_47 = arith.constant 1.000000e+00 : f32
    %142 = vector.broadcast %cst_47 : f32 to vector<8x128xf32>
    %143 = arith.addf %142, %141 : vector<8x128xf32>
    %144 = arith.divf %142, %143 : vector<8x128xf32>
    %145 = vector.extract_strided_slice %124 {offsets = [0, 256], sizes = [8, 128], strides = [1, 1]} : vector<8x384xf32> to vector<8x128xf32>
    %146 = vector.extract_strided_slice %128 {offsets = [0, 256], sizes = [8, 128], strides = [1, 1]} : vector<8x384xf32> to vector<8x128xf32>
    %147 = arith.mulf %136, %146 : vector<8x128xf32>
    %148 = arith.addf %145, %147 : vector<8x128xf32>
    %149 = math.tanh %148 : vector<8x128xf32>
    %cst_48 = arith.constant 1.000000e+00 : f32
    %150 = vector.broadcast %cst_48 : f32 to vector<8x128xf32>
    %151 = arith.subf %150, %144 : vector<8x128xf32>
    %152 = arith.mulf %151, %149 : vector<8x128xf32>
    %153 = arith.mulf %144, %121 : vector<8x128xf32>
    %154 = arith.addf %152, %153 : vector<8x128xf32>
    %c0_49 = arith.constant 0 : index
    %c0_50 = arith.constant 0 : index
    %155 = vector.load %arg5[%c0_49, %c0_50] : memref<8x128xf32, #tpu.memory_space<vmem>>, vector<8x128xf32>
    tpu.vector_store %arg5[%c0_49, %c0_50], %154 {strides = array<i32>} : memref<8x128xf32, #tpu.memory_space<vmem>>, vector<8x128xf32>,
    %156 = arith.index_cast %c3_i32 : i32 to index
    %c0_51 = arith.constant 0 : index
    %c0_52 = arith.constant 0 : index
    %157 = vector.load %arg4[%156, %c0_51, %c0_52] : memref<8x8x128xf32, #tpu.memory_space<vmem>>, vector<1x8x128xf32>
    %158 = vector.shape_cast %157 : vector<1x8x128xf32> to vector<8x128xf32>
    %159 = vector.shape_cast %154 : vector<8x128xf32> to vector<1x8x128xf32>
    tpu.vector_store %arg4[%156, %c0_51, %c0_52], %159 {strides = array<i32>} : memref<8x8x128xf32, #tpu.memory_space<vmem>>, vector<1x8x128xf32>,
    %c4_i32 = arith.constant 4 : i32
    %c0_53 = arith.constant 0 : index
    %c0_54 = arith.constant 0 : index
    %160 = vector.load %arg5[%c0_53, %c0_54] : memref<8x128xf32, #tpu.memory_space<vmem>>, vector<8x128xf32>
    %161 = arith.index_cast %c4_i32 : i32 to index
    %c0_55 = arith.constant 0 : index
    %c0_56 = arith.constant 0 : index
    %162 = vector.load %arg1[%161, %c0_55, %c0_56] : memref<8x8x384xf32, #tpu.memory_space<vmem>>, vector<1x8x384xf32>
    %163 = vector.shape_cast %162 : vector<1x8x384xf32> to vector<8x384xf32>
    %164 = arith.truncf %160 : vector<8x128xf32> to vector<8x128xbf16>
    %cst_57 = arith.constant dense<0.000000e+00> : vector<8x384xf32>
    %165 = tpu.matmul %164, %3, %cst_57 {dimension_numbers = #tpu.dot_dimension_numbers<[1], [0], [0], [1], [0, 0, 1, 1], [], []>} : vector<8x128xbf16>, vector<128x384xbf16>, vector<8x384xf32> -> vector<8x384xf32>
    %166 = vector.broadcast %2 : vector<1x384xf32> to vector<8x384xf32>
    %167 = arith.addf %165, %166 : vector<8x384xf32>
    %168 = vector.extract_strided_slice %163 {offsets = [0, 0], sizes = [8, 128], strides = [1, 1]} : vector<8x384xf32> to vector<8x128xf32>
    %169 = vector.extract_strided_slice %167 {offsets = [0, 0], sizes = [8, 128], strides = [1, 1]} : vector<8x384xf32> to vector<8x128xf32>
    %170 = arith.addf %168, %169 : vector<8x128xf32>
    %171 = arith.negf %170 : vector<8x128xf32>
    %172 = math.exp %171 : vector<8x128xf32>
    %cst_58 = arith.constant 1.000000e+00 : f32
    %173 = vector.broadcast %cst_58 : f32 to vector<8x128xf32>
    %174 = arith.addf %173, %172 : vector<8x128xf32>
    %175 = arith.divf %173, %174 : vector<8x128xf32>
    %176 = vector.extract_strided_slice %163 {offsets = [0, 128], sizes = [8, 128], strides = [1, 1]} : vector<8x384xf32> to vector<8x128xf32>
    %177 = vector.extract_strided_slice %167 {offsets = [0, 128], sizes = [8, 128], strides = [1, 1]} : vector<8x384xf32> to vector<8x128xf32>
    %178 = arith.addf %176, %177 : vector<8x128xf32>
    %179 = arith.negf %178 : vector<8x128xf32>
    %180 = math.exp %179 : vector<8x128xf32>
    %cst_59 = arith.constant 1.000000e+00 : f32
    %181 = vector.broadcast %cst_59 : f32 to vector<8x128xf32>
    %182 = arith.addf %181, %180 : vector<8x128xf32>
    %183 = arith.divf %181, %182 : vector<8x128xf32>
    %184 = vector.extract_strided_slice %163 {offsets = [0, 256], sizes = [8, 128], strides = [1, 1]} : vector<8x384xf32> to vector<8x128xf32>
    %185 = vector.extract_strided_slice %167 {offsets = [0, 256], sizes = [8, 128], strides = [1, 1]} : vector<8x384xf32> to vector<8x128xf32>
    %186 = arith.mulf %175, %185 : vector<8x128xf32>
    %187 = arith.addf %184, %186 : vector<8x128xf32>
    %188 = math.tanh %187 : vector<8x128xf32>
    %cst_60 = arith.constant 1.000000e+00 : f32
    %189 = vector.broadcast %cst_60 : f32 to vector<8x128xf32>
    %190 = arith.subf %189, %183 : vector<8x128xf32>
    %191 = arith.mulf %190, %188 : vector<8x128xf32>
    %192 = arith.mulf %183, %160 : vector<8x128xf32>
    %193 = arith.addf %191, %192 : vector<8x128xf32>
    %c0_61 = arith.constant 0 : index
    %c0_62 = arith.constant 0 : index
    %194 = vector.load %arg5[%c0_61, %c0_62] : memref<8x128xf32, #tpu.memory_space<vmem>>, vector<8x128xf32>
    tpu.vector_store %arg5[%c0_61, %c0_62], %193 {strides = array<i32>} : memref<8x128xf32, #tpu.memory_space<vmem>>, vector<8x128xf32>,
    %195 = arith.index_cast %c4_i32 : i32 to index
    %c0_63 = arith.constant 0 : index
    %c0_64 = arith.constant 0 : index
    %196 = vector.load %arg4[%195, %c0_63, %c0_64] : memref<8x8x128xf32, #tpu.memory_space<vmem>>, vector<1x8x128xf32>
    %197 = vector.shape_cast %196 : vector<1x8x128xf32> to vector<8x128xf32>
    %198 = vector.shape_cast %193 : vector<8x128xf32> to vector<1x8x128xf32>
    tpu.vector_store %arg4[%195, %c0_63, %c0_64], %198 {strides = array<i32>} : memref<8x8x128xf32, #tpu.memory_space<vmem>>, vector<1x8x128xf32>,
    %c5_i32 = arith.constant 5 : i32
    %c0_65 = arith.constant 0 : index
    %c0_66 = arith.constant 0 : index
    %199 = vector.load %arg5[%c0_65, %c0_66] : memref<8x128xf32, #tpu.memory_space<vmem>>, vector<8x128xf32>
    %200 = arith.index_cast %c5_i32 : i32 to index
    %c0_67 = arith.constant 0 : index
    %c0_68 = arith.constant 0 : index
    %201 = vector.load %arg1[%200, %c0_67, %c0_68] : memref<8x8x384xf32, #tpu.memory_space<vmem>>, vector<1x8x384xf32>
    %202 = vector.shape_cast %201 : vector<1x8x384xf32> to vector<8x384xf32>
    %203 = arith.truncf %199 : vector<8x128xf32> to vector<8x128xbf16>
    %cst_69 = arith.constant dense<0.000000e+00> : vector<8x384xf32>
    %204 = tpu.matmul %203, %3, %cst_69 {dimension_numbers = #tpu.dot_dimension_numbers<[1], [0], [0], [1], [0, 0, 1, 1], [], []>} : vector<8x128xbf16>, vector<128x384xbf16>, vector<8x384xf32> -> vector<8x384xf32>
    %205 = vector.broadcast %2 : vector<1x384xf32> to vector<8x384xf32>
    %206 = arith.addf %204, %205 : vector<8x384xf32>
    %207 = vector.extract_strided_slice %202 {offsets = [0, 0], sizes = [8, 128], strides = [1, 1]} : vector<8x384xf32> to vector<8x128xf32>
    %208 = vector.extract_strided_slice %206 {offsets = [0, 0], sizes = [8, 128], strides = [1, 1]} : vector<8x384xf32> to vector<8x128xf32>
    %209 = arith.addf %207, %208 : vector<8x128xf32>
    %210 = arith.negf %209 : vector<8x128xf32>
    %211 = math.exp %210 : vector<8x128xf32>
    %cst_70 = arith.constant 1.000000e+00 : f32
    %212 = vector.broadcast %cst_70 : f32 to vector<8x128xf32>
    %213 = arith.addf %212, %211 : vector<8x128xf32>
    %214 = arith.divf %212, %213 : vector<8x128xf32>
    %215 = vector.extract_strided_slice %202 {offsets = [0, 128], sizes = [8, 128], strides = [1, 1]} : vector<8x384xf32> to vector<8x128xf32>
    %216 = vector.extract_strided_slice %206 {offsets = [0, 128], sizes = [8, 128], strides = [1, 1]} : vector<8x384xf32> to vector<8x128xf32>
    %217 = arith.addf %215, %216 : vector<8x128xf32>
    %218 = arith.negf %217 : vector<8x128xf32>
    %219 = math.exp %218 : vector<8x128xf32>
    %cst_71 = arith.constant 1.000000e+00 : f32
    %220 = vector.broadcast %cst_71 : f32 to vector<8x128xf32>
    %221 = arith.addf %220, %219 : vector<8x128xf32>
    %222 = arith.divf %220, %221 : vector<8x128xf32>
    %223 = vector.extract_strided_slice %202 {offsets = [0, 256], sizes = [8, 128], strides = [1, 1]} : vector<8x384xf32> to vector<8x128xf32>
    %224 = vector.extract_strided_slice %206 {offsets = [0, 256], sizes = [8, 128], strides = [1, 1]} : vector<8x384xf32> to vector<8x128xf32>
    %225 = arith.mulf %214, %224 : vector<8x128xf32>
    %226 = arith.addf %223, %225 : vector<8x128xf32>
    %227 = math.tanh %226 : vector<8x128xf32>
    %cst_72 = arith.constant 1.000000e+00 : f32
    %228 = vector.broadcast %cst_72 : f32 to vector<8x128xf32>
    %229 = arith.subf %228, %222 : vector<8x128xf32>
    %230 = arith.mulf %229, %227 : vector<8x128xf32>
    %231 = arith.mulf %222, %199 : vector<8x128xf32>
    %232 = arith.addf %230, %231 : vector<8x128xf32>
    %c0_73 = arith.constant 0 : index
    %c0_74 = arith.constant 0 : index
    %233 = vector.load %arg5[%c0_73, %c0_74] : memref<8x128xf32, #tpu.memory_space<vmem>>, vector<8x128xf32>
    tpu.vector_store %arg5[%c0_73, %c0_74], %232 {strides = array<i32>} : memref<8x128xf32, #tpu.memory_space<vmem>>, vector<8x128xf32>,
    %234 = arith.index_cast %c5_i32 : i32 to index
    %c0_75 = arith.constant 0 : index
    %c0_76 = arith.constant 0 : index
    %235 = vector.load %arg4[%234, %c0_75, %c0_76] : memref<8x8x128xf32, #tpu.memory_space<vmem>>, vector<1x8x128xf32>
    %236 = vector.shape_cast %235 : vector<1x8x128xf32> to vector<8x128xf32>
    %237 = vector.shape_cast %232 : vector<8x128xf32> to vector<1x8x128xf32>
    tpu.vector_store %arg4[%234, %c0_75, %c0_76], %237 {strides = array<i32>} : memref<8x8x128xf32, #tpu.memory_space<vmem>>, vector<1x8x128xf32>,
    %c6_i32 = arith.constant 6 : i32
    %c0_77 = arith.constant 0 : index
    %c0_78 = arith.constant 0 : index
    %238 = vector.load %arg5[%c0_77, %c0_78] : memref<8x128xf32, #tpu.memory_space<vmem>>, vector<8x128xf32>
    %239 = arith.index_cast %c6_i32 : i32 to index
    %c0_79 = arith.constant 0 : index
    %c0_80 = arith.constant 0 : index
    %240 = vector.load %arg1[%239, %c0_79, %c0_80] : memref<8x8x384xf32, #tpu.memory_space<vmem>>, vector<1x8x384xf32>
    %241 = vector.shape_cast %240 : vector<1x8x384xf32> to vector<8x384xf32>
    %242 = arith.truncf %238 : vector<8x128xf32> to vector<8x128xbf16>
    %cst_81 = arith.constant dense<0.000000e+00> : vector<8x384xf32>
    %243 = tpu.matmul %242, %3, %cst_81 {dimension_numbers = #tpu.dot_dimension_numbers<[1], [0], [0], [1], [0, 0, 1, 1], [], []>} : vector<8x128xbf16>, vector<128x384xbf16>, vector<8x384xf32> -> vector<8x384xf32>
    %244 = vector.broadcast %2 : vector<1x384xf32> to vector<8x384xf32>
    %245 = arith.addf %243, %244 : vector<8x384xf32>
    %246 = vector.extract_strided_slice %241 {offsets = [0, 0], sizes = [8, 128], strides = [1, 1]} : vector<8x384xf32> to vector<8x128xf32>
    %247 = vector.extract_strided_slice %245 {offsets = [0, 0], sizes = [8, 128], strides = [1, 1]} : vector<8x384xf32> to vector<8x128xf32>
    %248 = arith.addf %246, %247 : vector<8x128xf32>
    %249 = arith.negf %248 : vector<8x128xf32>
    %250 = math.exp %249 : vector<8x128xf32>
    %cst_82 = arith.constant 1.000000e+00 : f32
    %251 = vector.broadcast %cst_82 : f32 to vector<8x128xf32>
    %252 = arith.addf %251, %250 : vector<8x128xf32>
    %253 = arith.divf %251, %252 : vector<8x128xf32>
    %254 = vector.extract_strided_slice %241 {offsets = [0, 128], sizes = [8, 128], strides = [1, 1]} : vector<8x384xf32> to vector<8x128xf32>
    %255 = vector.extract_strided_slice %245 {offsets = [0, 128], sizes = [8, 128], strides = [1, 1]} : vector<8x384xf32> to vector<8x128xf32>
    %256 = arith.addf %254, %255 : vector<8x128xf32>
    %257 = arith.negf %256 : vector<8x128xf32>
    %258 = math.exp %257 : vector<8x128xf32>
    %cst_83 = arith.constant 1.000000e+00 : f32
    %259 = vector.broadcast %cst_83 : f32 to vector<8x128xf32>
    %260 = arith.addf %259, %258 : vector<8x128xf32>
    %261 = arith.divf %259, %260 : vector<8x128xf32>
    %262 = vector.extract_strided_slice %241 {offsets = [0, 256], sizes = [8, 128], strides = [1, 1]} : vector<8x384xf32> to vector<8x128xf32>
    %263 = vector.extract_strided_slice %245 {offsets = [0, 256], sizes = [8, 128], strides = [1, 1]} : vector<8x384xf32> to vector<8x128xf32>
    %264 = arith.mulf %253, %263 : vector<8x128xf32>
    %265 = arith.addf %262, %264 : vector<8x128xf32>
    %266 = math.tanh %265 : vector<8x128xf32>
    %cst_84 = arith.constant 1.000000e+00 : f32
    %267 = vector.broadcast %cst_84 : f32 to vector<8x128xf32>
    %268 = arith.subf %267, %261 : vector<8x128xf32>
    %269 = arith.mulf %268, %266 : vector<8x128xf32>
    %270 = arith.mulf %261, %238 : vector<8x128xf32>
    %271 = arith.addf %269, %270 : vector<8x128xf32>
    %c0_85 = arith.constant 0 : index
    %c0_86 = arith.constant 0 : index
    %272 = vector.load %arg5[%c0_85, %c0_86] : memref<8x128xf32, #tpu.memory_space<vmem>>, vector<8x128xf32>
    tpu.vector_store %arg5[%c0_85, %c0_86], %271 {strides = array<i32>} : memref<8x128xf32, #tpu.memory_space<vmem>>, vector<8x128xf32>,
    %273 = arith.index_cast %c6_i32 : i32 to index
    %c0_87 = arith.constant 0 : index
    %c0_88 = arith.constant 0 : index
    %274 = vector.load %arg4[%273, %c0_87, %c0_88] : memref<8x8x128xf32, #tpu.memory_space<vmem>>, vector<1x8x128xf32>
    %275 = vector.shape_cast %274 : vector<1x8x128xf32> to vector<8x128xf32>
    %276 = vector.shape_cast %271 : vector<8x128xf32> to vector<1x8x128xf32>
    tpu.vector_store %arg4[%273, %c0_87, %c0_88], %276 {strides = array<i32>} : memref<8x8x128xf32, #tpu.memory_space<vmem>>, vector<1x8x128xf32>,
    %c7_i32 = arith.constant 7 : i32
    %c0_89 = arith.constant 0 : index
    %c0_90 = arith.constant 0 : index
    %277 = vector.load %arg5[%c0_89, %c0_90] : memref<8x128xf32, #tpu.memory_space<vmem>>, vector<8x128xf32>
    %278 = arith.index_cast %c7_i32 : i32 to index
    %c0_91 = arith.constant 0 : index
    %c0_92 = arith.constant 0 : index
    %279 = vector.load %arg1[%278, %c0_91, %c0_92] : memref<8x8x384xf32, #tpu.memory_space<vmem>>, vector<1x8x384xf32>
    %280 = vector.shape_cast %279 : vector<1x8x384xf32> to vector<8x384xf32>
    %281 = arith.truncf %277 : vector<8x128xf32> to vector<8x128xbf16>
    %cst_93 = arith.constant dense<0.000000e+00> : vector<8x384xf32>
    %282 = tpu.matmul %281, %3, %cst_93 {dimension_numbers = #tpu.dot_dimension_numbers<[1], [0], [0], [1], [0, 0, 1, 1], [], []>} : vector<8x128xbf16>, vector<128x384xbf16>, vector<8x384xf32> -> vector<8x384xf32>
    %283 = vector.broadcast %2 : vector<1x384xf32> to vector<8x384xf32>
    %284 = arith.addf %282, %283 : vector<8x384xf32>
    %285 = vector.extract_strided_slice %280 {offsets = [0, 0], sizes = [8, 128], strides = [1, 1]} : vector<8x384xf32> to vector<8x128xf32>
    %286 = vector.extract_strided_slice %284 {offsets = [0, 0], sizes = [8, 128], strides = [1, 1]} : vector<8x384xf32> to vector<8x128xf32>
    %287 = arith.addf %285, %286 : vector<8x128xf32>
    %288 = arith.negf %287 : vector<8x128xf32>
    %289 = math.exp %288 : vector<8x128xf32>
    %cst_94 = arith.constant 1.000000e+00 : f32
    %290 = vector.broadcast %cst_94 : f32 to vector<8x128xf32>
    %291 = arith.addf %290, %289 : vector<8x128xf32>
    %292 = arith.divf %290, %291 : vector<8x128xf32>
    %293 = vector.extract_strided_slice %280 {offsets = [0, 128], sizes = [8, 128], strides = [1, 1]} : vector<8x384xf32> to vector<8x128xf32>
    %294 = vector.extract_strided_slice %284 {offsets = [0, 128], sizes = [8, 128], strides = [1, 1]} : vector<8x384xf32> to vector<8x128xf32>
    %295 = arith.addf %293, %294 : vector<8x128xf32>
    %296 = arith.negf %295 : vector<8x128xf32>
    %297 = math.exp %296 : vector<8x128xf32>
    %cst_95 = arith.constant 1.000000e+00 : f32
    %298 = vector.broadcast %cst_95 : f32 to vector<8x128xf32>
    %299 = arith.addf %298, %297 : vector<8x128xf32>
    %300 = arith.divf %298, %299 : vector<8x128xf32>
    %301 = vector.extract_strided_slice %280 {offsets = [0, 256], sizes = [8, 128], strides = [1, 1]} : vector<8x384xf32> to vector<8x128xf32>
    %302 = vector.extract_strided_slice %284 {offsets = [0, 256], sizes = [8, 128], strides = [1, 1]} : vector<8x384xf32> to vector<8x128xf32>
    %303 = arith.mulf %292, %302 : vector<8x128xf32>
    %304 = arith.addf %301, %303 : vector<8x128xf32>
    %305 = math.tanh %304 : vector<8x128xf32>
    %cst_96 = arith.constant 1.000000e+00 : f32
    %306 = vector.broadcast %cst_96 : f32 to vector<8x128xf32>
    %307 = arith.subf %306, %300 : vector<8x128xf32>
    %308 = arith.mulf %307, %305 : vector<8x128xf32>
    %309 = arith.mulf %300, %277 : vector<8x128xf32>
    %310 = arith.addf %308, %309 : vector<8x128xf32>
    %c0_97 = arith.constant 0 : index
    %c0_98 = arith.constant 0 : index
    %311 = vector.load %arg5[%c0_97, %c0_98] : memref<8x128xf32, #tpu.memory_space<vmem>>, vector<8x128xf32>
    tpu.vector_store %arg5[%c0_97, %c0_98], %310 {strides = array<i32>} : memref<8x128xf32, #tpu.memory_space<vmem>>, vector<8x128xf32>,
    %312 = arith.index_cast %c7_i32 : i32 to index
    %c0_99 = arith.constant 0 : index
    %c0_100 = arith.constant 0 : index
    %313 = vector.load %arg4[%312, %c0_99, %c0_100] : memref<8x8x128xf32, #tpu.memory_space<vmem>>, vector<1x8x128xf32>
    %314 = vector.shape_cast %313 : vector<1x8x128xf32> to vector<8x128xf32>
    %315 = vector.shape_cast %310 : vector<8x128xf32> to vector<1x8x128xf32>
    tpu.vector_store %arg4[%312, %c0_99, %c0_100], %315 {strides = array<i32>} : memref<8x8x128xf32, #tpu.memory_space<vmem>>, vector<1x8x128xf32>,
    %c8_i32 = arith.constant 8 : i32
    return
  }
  func.func @transform_0(%arg0: i32) -> (i32, i32, i32) {
    %c0_i32 = arith.constant 0 : i32
    %c0_i32_0 = arith.constant 0 : i32
    %c0_i32_1 = arith.constant 0 : i32
    %c0_i32_2 = arith.constant 0 : i32
    return %c0_i32, %c0_i32_0, %c0_i32_1 : i32, i32, i32
  }
  func.func @transform_1(%arg0: i32) -> (i32, i32) {
    %c0_i32 = arith.constant 0 : i32
    %c0_i32_0 = arith.constant 0 : i32
    %c0_i32_1 = arith.constant 0 : i32
    return %c0_i32, %c0_i32_0 : i32, i32
  }
  func.func @transform_2(%arg0: i32) -> (i32, i32) {
    %c0_i32 = arith.constant 0 : i32
    %c0_i32_0 = arith.constant 0 : i32
    %c0_i32_1 = arith.constant 0 : i32
    return %c0_i32, %c0_i32_0 : i32, i32
  }
  func.func @transform_3(%arg0: i32) -> (i32, i32, i32) {
    %c0_i32 = arith.constant 0 : i32
    %c0_i32_0 = arith.constant 0 : i32
    %c0_i32_1 = arith.constant 0 : i32
    %c0_i32_2 = arith.constant 0 : i32
    return %c0_i32, %c0_i32_0, %c0_i32_1 : i32, i32, i32
  }
}

module attributes {stable_mosaic.version = 11 : i64} {
  func.func @_matmul_bias_kernel(%arg0: i32, %arg1: i32, %arg2: i32, %arg3: memref<64x32xbf16, #tpu.memory_space<vmem>>, %arg4: memref<32x128xbf16, #tpu.memory_space<vmem>>, %arg5: memref<1x128xf32, #tpu.memory_space<vmem>>, %arg6: memref<64x128xf32, #tpu.memory_space<vmem>>, %arg7: memref<64x128xf32, #tpu.memory_space<vmem>>) attributes {dimension_semantics = [#tpu.dimension_semantics<parallel>, #tpu.dimension_semantics<parallel>, #tpu.dimension_semantics<arbitrary>], iteration_bounds = array<i64: 1, 3, 1>, scalar_prefetch = 0 : i64, scratch_operands = 1 : i64, tpu.core_type = #tpu.core_type<tc>, window_params = [{transform_indices = @transform_0, window_bounds = array<i64: 64, 32>}, {transform_indices = @transform_1, window_bounds = array<i64: 32, 128>}, {transform_indices = @transform_2, window_bounds = array<i64: 1, 128>}, {transform_indices = @transform_3, window_bounds = array<i64: 64, 128>}]} {
    %c0_i32 = arith.constant 0 : i32
    %0 = arith.cmpi eq, %arg2, %c0_i32 : i32
    %1 = arith.extui %0 : i1 to i32
    %c0_i32_0 = arith.constant 0 : i32
    %2 = arith.cmpi ne, %1, %c0_i32_0 : i32
    scf.if %2 {
      %cst_10 = arith.constant 0.000000e+00 : f32
      %12 = vector.broadcast %cst_10 : f32 to vector<64x128xf32>
      %c0_11 = arith.constant 0 : index
      %c0_12 = arith.constant 0 : index
      %13 = vector.load %arg7[%c0_11, %c0_12] : memref<64x128xf32, #tpu.memory_space<vmem>>, vector<64x128xf32>
      tpu.vector_store %arg7[%c0_11, %c0_12], %12 {strides = array<i32>} : memref<64x128xf32, #tpu.memory_space<vmem>>, vector<64x128xf32>,
    } else {
    }
    %c0 = arith.constant 0 : index
    %c0_1 = arith.constant 0 : index
    %3 = vector.load %arg7[%c0, %c0_1] : memref<64x128xf32, #tpu.memory_space<vmem>>, vector<64x128xf32>
    %c0_2 = arith.constant 0 : index
    %c0_3 = arith.constant 0 : index
    %4 = vector.load %arg3[%c0_2, %c0_3] : memref<64x32xbf16, #tpu.memory_space<vmem>>, vector<64x32xbf16>
    %c0_4 = arith.constant 0 : index
    %c0_5 = arith.constant 0 : index
    %5 = vector.load %arg4[%c0_4, %c0_5] : memref<32x128xbf16, #tpu.memory_space<vmem>>, vector<32x128xbf16>
    %cst = arith.constant dense<0.000000e+00> : vector<64x128xf32>
    %6 = tpu.matmul %4, %5, %cst {dimension_numbers = #tpu.dot_dimension_numbers<[1], [0], [0], [1], [0, 0, 1, 1], [], []>} : vector<64x32xbf16>, vector<32x128xbf16>, vector<64x128xf32> -> vector<64x128xf32>
    %7 = arith.addf %3, %6 : vector<64x128xf32>
    %c0_6 = arith.constant 0 : index
    %c0_7 = arith.constant 0 : index
    %8 = vector.load %arg7[%c0_6, %c0_7] : memref<64x128xf32, #tpu.memory_space<vmem>>, vector<64x128xf32>
    tpu.vector_store %arg7[%c0_6, %c0_7], %7 {strides = array<i32>} : memref<64x128xf32, #tpu.memory_space<vmem>>, vector<64x128xf32>,
    %c0_i32_8 = arith.constant 0 : i32
    %9 = arith.cmpi eq, %arg2, %c0_i32_8 : i32
    %10 = arith.extui %9 : i1 to i32
    %c0_i32_9 = arith.constant 0 : i32
    %11 = arith.cmpi ne, %10, %c0_i32_9 : i32
    scf.if %11 {
      %c0_10 = arith.constant 0 : index
      %c0_11 = arith.constant 0 : index
      %12 = vector.load %arg7[%c0_10, %c0_11] : memref<64x128xf32, #tpu.memory_space<vmem>>, vector<64x128xf32>
      %c0_12 = arith.constant 0 : index
      %c0_13 = arith.constant 0 : index
      %13 = vector.load %arg5[%c0_12, %c0_13] : memref<1x128xf32, #tpu.memory_space<vmem>>, vector<1x128xf32>
      %14 = vector.broadcast %13 : vector<1x128xf32> to vector<64x128xf32>
      %15 = arith.addf %12, %14 : vector<64x128xf32>
      %c0_14 = arith.constant 0 : index
      %c0_15 = arith.constant 0 : index
      %16 = vector.load %arg6[%c0_14, %c0_15] : memref<64x128xf32, #tpu.memory_space<vmem>>, vector<64x128xf32>
      tpu.vector_store %arg6[%c0_14, %c0_15], %15 {strides = array<i32>} : memref<64x128xf32, #tpu.memory_space<vmem>>, vector<64x128xf32>,
    } else {
    }
    return
  }
  func.func @transform_0(%arg0: i32, %arg1: i32, %arg2: i32) -> (i32, i32) {
    %c0_i32 = arith.constant 0 : i32
    return %arg0, %arg2 : i32, i32
  }
  func.func @transform_1(%arg0: i32, %arg1: i32, %arg2: i32) -> (i32, i32) {
    %c0_i32 = arith.constant 0 : i32
    return %arg2, %arg1 : i32, i32
  }
  func.func @transform_2(%arg0: i32, %arg1: i32, %arg2: i32) -> (i32, i32) {
    %c0_i32 = arith.constant 0 : i32
    %c0_i32_0 = arith.constant 0 : i32
    return %c0_i32, %arg1 : i32, i32
  }
  func.func @transform_3(%arg0: i32, %arg1: i32, %arg2: i32) -> (i32, i32) {
    %c0_i32 = arith.constant 0 : i32
    return %arg0, %arg1 : i32, i32
  }
}

module attributes {stable_mosaic.version = 11 : i64} {
  func.func @_matmul_bias_kernel(%arg0: i32, %arg1: i32, %arg2: i32, %arg3: memref<64x128xbf16, #tpu.memory_space<vmem>>, %arg4: memref<128x128xbf16, #tpu.memory_space<vmem>>, %arg5: memref<1x128xf32, #tpu.memory_space<vmem>>, %arg6: memref<64x128xf32, #tpu.memory_space<vmem>>, %arg7: memref<64x128xf32, #tpu.memory_space<vmem>>) attributes {dimension_semantics = [#tpu.dimension_semantics<parallel>, #tpu.dimension_semantics<parallel>, #tpu.dimension_semantics<arbitrary>], iteration_bounds = array<i64: 1, 1, 1>, scalar_prefetch = 0 : i64, scratch_operands = 1 : i64, tpu.core_type = #tpu.core_type<tc>, window_params = [{transform_indices = @transform_0, window_bounds = array<i64: 64, 128>}, {transform_indices = @transform_1, window_bounds = array<i64: 128, 128>}, {transform_indices = @transform_2, window_bounds = array<i64: 1, 128>}, {transform_indices = @transform_3, window_bounds = array<i64: 64, 128>}]} {
    %c0_i32 = arith.constant 0 : i32
    %0 = arith.cmpi eq, %arg2, %c0_i32 : i32
    %1 = arith.extui %0 : i1 to i32
    %c0_i32_0 = arith.constant 0 : i32
    %2 = arith.cmpi ne, %1, %c0_i32_0 : i32
    scf.if %2 {
      %cst_10 = arith.constant 0.000000e+00 : f32
      %12 = vector.broadcast %cst_10 : f32 to vector<64x128xf32>
      %c0_11 = arith.constant 0 : index
      %c0_12 = arith.constant 0 : index
      %13 = vector.load %arg7[%c0_11, %c0_12] : memref<64x128xf32, #tpu.memory_space<vmem>>, vector<64x128xf32>
      tpu.vector_store %arg7[%c0_11, %c0_12], %12 {strides = array<i32>} : memref<64x128xf32, #tpu.memory_space<vmem>>, vector<64x128xf32>,
    } else {
    }
    %c0 = arith.constant 0 : index
    %c0_1 = arith.constant 0 : index
    %3 = vector.load %arg7[%c0, %c0_1] : memref<64x128xf32, #tpu.memory_space<vmem>>, vector<64x128xf32>
    %c0_2 = arith.constant 0 : index
    %c0_3 = arith.constant 0 : index
    %4 = vector.load %arg3[%c0_2, %c0_3] : memref<64x128xbf16, #tpu.memory_space<vmem>>, vector<64x128xbf16>
    %c0_4 = arith.constant 0 : index
    %c0_5 = arith.constant 0 : index
    %5 = vector.load %arg4[%c0_4, %c0_5] : memref<128x128xbf16, #tpu.memory_space<vmem>>, vector<128x128xbf16>
    %cst = arith.constant dense<0.000000e+00> : vector<64x128xf32>
    %6 = tpu.matmul %4, %5, %cst {dimension_numbers = #tpu.dot_dimension_numbers<[1], [0], [0], [1], [0, 0, 1, 1], [], []>} : vector<64x128xbf16>, vector<128x128xbf16>, vector<64x128xf32> -> vector<64x128xf32>
    %7 = arith.addf %3, %6 : vector<64x128xf32>
    %c0_6 = arith.constant 0 : index
    %c0_7 = arith.constant 0 : index
    %8 = vector.load %arg7[%c0_6, %c0_7] : memref<64x128xf32, #tpu.memory_space<vmem>>, vector<64x128xf32>
    tpu.vector_store %arg7[%c0_6, %c0_7], %7 {strides = array<i32>} : memref<64x128xf32, #tpu.memory_space<vmem>>, vector<64x128xf32>,
    %c0_i32_8 = arith.constant 0 : i32
    %9 = arith.cmpi eq, %arg2, %c0_i32_8 : i32
    %10 = arith.extui %9 : i1 to i32
    %c0_i32_9 = arith.constant 0 : i32
    %11 = arith.cmpi ne, %10, %c0_i32_9 : i32
    scf.if %11 {
      %c0_10 = arith.constant 0 : index
      %c0_11 = arith.constant 0 : index
      %12 = vector.load %arg7[%c0_10, %c0_11] : memref<64x128xf32, #tpu.memory_space<vmem>>, vector<64x128xf32>
      %c0_12 = arith.constant 0 : index
      %c0_13 = arith.constant 0 : index
      %13 = vector.load %arg5[%c0_12, %c0_13] : memref<1x128xf32, #tpu.memory_space<vmem>>, vector<1x128xf32>
      %14 = vector.broadcast %13 : vector<1x128xf32> to vector<64x128xf32>
      %15 = arith.addf %12, %14 : vector<64x128xf32>
      %c0_14 = arith.constant 0 : index
      %c0_15 = arith.constant 0 : index
      %16 = vector.load %arg6[%c0_14, %c0_15] : memref<64x128xf32, #tpu.memory_space<vmem>>, vector<64x128xf32>
      tpu.vector_store %arg6[%c0_14, %c0_15], %15 {strides = array<i32>} : memref<64x128xf32, #tpu.memory_space<vmem>>, vector<64x128xf32>,
    } else {
    }
    return
  }
  func.func @transform_0(%arg0: i32, %arg1: i32, %arg2: i32) -> (i32, i32) {
    %c0_i32 = arith.constant 0 : i32
    return %arg0, %arg2 : i32, i32
  }
  func.func @transform_1(%arg0: i32, %arg1: i32, %arg2: i32) -> (i32, i32) {
    %c0_i32 = arith.constant 0 : i32
    return %arg2, %arg1 : i32, i32
  }
  func.func @transform_2(%arg0: i32, %arg1: i32, %arg2: i32) -> (i32, i32) {
    %c0_i32 = arith.constant 0 : i32
    %c0_i32_0 = arith.constant 0 : i32
    return %c0_i32, %arg1 : i32, i32
  }
  func.func @transform_3(%arg0: i32, %arg1: i32, %arg2: i32) -> (i32, i32) {
    %c0_i32 = arith.constant 0 : i32
    return %arg0, %arg1 : i32, i32
  }
}

</mosaic_0001>

<llo_original>
// kernel: decoder_rnn_forward.3
$region0: #{decoder_rnn_forward.3}
  #allocation0 [shape = 'u32[]', space=smem, size = 0x4, offset = 0x4, fixed_abs, tag = 'smem constant byte address 0x4 - core index']
  #allocation1 [shape = 'u32[72,128]{1,0:T(1,128)}', space=vmem, size = 0x9000, scoped, tag = 'internal scratch']
  #allocation2 [shape = 'f32[64,128]{1,0:T(8,128)}', space=vmem, size = 0x8000, scoped, tag = 'scratch operand']
  %s0 = inlined_call_operand.vmem [shape: bf16[64,32], index: 0, kind: input, shape index: {}]
  %s1 = inlined_call_operand.vmem [shape: bf16[32,384], index: 1, kind: input, shape index: {}]
  %s2 = inlined_call_operand.vmem [shape: f32[1,384], index: 2, kind: input, shape index: {}]
  %s3 = inlined_call_operand.vmem [shape: f32[64,384], index: 3, kind: output, shape index: {}]
  %s4 = sld [smem:[#allocation0]]
  $region128: #{decoder_rnn_forward.3} parent=0
    _
  %s6 = ssub.s32 1, %s4
  %s7 = scalar_select 0, %s6, %s4
  $region1: #{decoder_rnn_forward.3} parent=0
    #allocation3 [shape = 'u8[16384]{0}', space=vmem, size = 0x4000, scoped, tag = 'input window, operand 1']
    #allocation4 [shape = 'u8[65536]{0}', space=vmem, size = 0x10000, scoped, tag = 'output window, operand 0']
    loop: start=0, step=1, limit=5
    $region2: #{decoder_rnn_forward.3} parent=1 // loop_pre_header
      _
    $region3: #{decoder_rnn_forward.3} parent=1 // loop_header
      %s9 = sphi 0, %s13
      %p10 = scmp.ge.s32.totalorder %s9, 5
      %s16 = sphi 0, %s35
      %s17 = sphi 0, %s31
      %s18 = sphi 0, %s27
      %s19 = sphi 0, %s16
      %s20 = sphi 0, %s17
      %s21 = sphi 0, %s18
      %s22 = sphi 0, %s19
      %s23 = sphi 0, %s20
      %s24 = sphi 0, %s21
      %s40 = sphi 0, %s42
      %s43 = sphi 0, %s40
      %s44 = sphi 0, %s43
      %s60 = sphi 0, %s44
      %s68 = sphi 0, %s70
      %s71 = sphi 0, %s68
      %s72 = sphi 0, %s71
      %s88 = sphi 0, %s72
      %s94 = sphi 0, %s96
      %s97 = sphi 0, %s94
      %s98 = sphi 0, %s97
      %s114 = sphi 0, %s98
      %s122 = sphi 0, %s124
      %s125 = sphi 0, %s122
      %s126 = sphi 0, %s125
      %s142 = sphi 0, %s126
    $region4: #{decoder_rnn_forward.3} parent=1 // loop_header_branch
      %12 = sbr.rel (%p10) target = $region8
    $region5: #{decoder_rnn_forward.3} parent=1 // loop_body
      %s14 = ssub.s32 %s9, 1
      %s15 = ssub.s32 %s9, 2
      %s25 = sadd.s32 1, %s18
      %p26 = scmp.ge.s32.totalorder %s25, 1
      %s27 = scalar_select %p26, 0, %s25
      %s28 = sadd.s32 1, %s17
      %s29 = scalar_select %p26, %s28, %s17
      %p30 = scmp.ge.s32.totalorder %s29, 3
      %s31 = scalar_select %p30, 0, %s29
      %s32 = sadd.s32 1, %s16
      %s33 = scalar_select %p30, %s32, %s16
      %p34 = scmp.ge.s32.totalorder %s33, 1
      %s35 = scalar_select %p34, 0, %s33
      %s36 = ssub.s32 %s16, %s35
      %s37 = ssub.s32 %s18, %s27
      %s38 = sor.u32 %s36, %s37
      %p39 = scmp.eq.s32.totalorder %s38, 0
      %s41 = sadd.s32 %s40, 1
      %s42 = scalar_select %p39, %s40, %s41
      %p45 = pneg %p39
      %p46 = scmp.eq.s32.totalorder %s9, 2
      %p47 = por %p45, %p46
      %p48 = scmp.ne.s32.totalorder %s40, %s43
      %p49 = scmp.eq.s32.totalorder %s9, 0
      %p50 = por %p48, %p49
      %p51 = scmp.ne.s32.totalorder %s40, %s43
      %p52 = scmp.eq.s32.totalorder %s14, 2
      %p53 = por %p51, %p52
      %p54 = scmp.ne.s32.totalorder %s43, %s44
      %p55 = scmp.eq.s32.totalorder %s14, 0
      %p56 = por %p54, %p55
      %p57 = scmp.ne.s32.totalorder %s43, %s44
      %p58 = scmp.eq.s32.totalorder %s15, 2
      %p59 = por %p57, %p58
      %p61 = scmp.ne.s32.totalorder %s44, %s60
      %p62 = scmp.eq.s32.totalorder %s15, 0
      %p63 = por %p61, %p62
      %s64 = ssub.s32 %s18, %s27
      %s65 = ssub.s32 %s17, %s31
      %s66 = sor.u32 %s64, %s65
      %p67 = scmp.eq.s32.totalorder %s66, 0
      %s69 = sadd.s32 %s68, 1
      %s70 = scalar_select %p67, %s68, %s69
      %p73 = pneg %p67
      %p74 = scmp.eq.s32.totalorder %s9, 2
      %p75 = por %p73, %p74
      %p76 = scmp.ne.s32.totalorder %s68, %s71
      %p77 = scmp.eq.s32.totalorder %s9, 0
      %p78 = por %p76, %p77
      %p79 = scmp.ne.s32.totalorder %s68, %s71
      %p80 = scmp.eq.s32.totalorder %s14, 2
      %p81 = por %p79, %p80
      %p82 = scmp.ne.s32.totalorder %s71, %s72
      %p83 = scmp.eq.s32.totalorder %s14, 0
      %p84 = por %p82, %p83
      %p85 = scmp.ne.s32.totalorder %s71, %s72
      %p86 = scmp.eq.s32.totalorder %s15, 2
      %p87 = por %p85, %p86
      %p89 = scmp.ne.s32.totalorder %s72, %s88
      %p90 = scmp.eq.s32.totalorder %s15, 0
      %p91 = por %p89, %p90
      %s92 = ssub.s32 %s17, %s31
      %p93 = scmp.eq.s32.totalorder %s92, 0
      %s95 = sadd.s32 %s94, 1
      %s96 = scalar_select %p93, %s94, %s95
      %p99 = pneg %p93
      %p100 = scmp.eq.s32.totalorder %s9, 2
      %p101 = por %p99, %p100
      %p102 = scmp.ne.s32.totalorder %s94, %s97
      %p103 = scmp.eq.s32.totalorder %s9, 0
      %p104 = por %p102, %p103
      %p105 = scmp.ne.s32.totalorder %s94, %s97
      %p106 = scmp.eq.s32.totalorder %s14, 2
      %p107 = por %p105, %p106
      %p108 = scmp.ne.s32.totalorder %s97, %s98
      %p109 = scmp.eq.s32.totalorder %s14, 0
      %p110 = por %p108, %p109
      %p111 = scmp.ne.s32.totalorder %s97, %s98
      %p112 = scmp.eq.s32.totalorder %s15, 2
      %p113 = por %p111, %p112
      %p115 = scmp.ne.s32.totalorder %s98, %s114
      %p116 = scmp.eq.s32.totalorder %s15, 0
      %p117 = por %p115, %p116
      %s118 = ssub.s32 %s16, %s35
      %s119 = ssub.s32 %s17, %s31
      %s120 = sor.u32 %s118, %s119
      %p121 = scmp.eq.s32.totalorder %s120, 0
      %s123 = sadd.s32 %s122, 1
      %s124 = scalar_select %p121, %s122, %s123
      %p127 = pneg %p121
      %p128 = scmp.eq.s32.totalorder %s9, 2
      %p129 = por %p127, %p128
      %p130 = scmp.ne.s32.totalorder %s122, %s125
      %p131 = scmp.eq.s32.totalorder %s9, 0
      %p132 = por %p130, %p131
      %p133 = scmp.ne.s32.totalorder %s122, %s125
      %p134 = scmp.eq.s32.totalorder %s14, 2
      %p135 = por %p133, %p134
      %p136 = scmp.ne.s32.totalorder %s125, %s126
      %p137 = scmp.eq.s32.totalorder %s14, 0
      %p138 = por %p136, %p137
      %p139 = scmp.ne.s32.totalorder %s125, %s126
      %p140 = scmp.eq.s32.totalorder %s15, 2
      %p141 = por %p139, %p140
      %p143 = scmp.ne.s32.totalorder %s126, %s142
      %p144 = scmp.eq.s32.totalorder %s15, 0
      %p145 = por %p143, %p144
      %p146 = scmp.le.s32.totalorder 1, %s9
      %p147 = scmp.lt.s32.totalorder %s9, 4
      %p148 = pnand %p146, %p147
      %p149 = pneg %p148
      // Predicated region
      $region9: #{decoder_rnn_forward.3} parent=5 // pred_check
        _
      $region10: #{decoder_rnn_forward.3} parent=5 // pred_check_branch
        %151 = sbr.rel (%p148) target = $region12
      $region11: #{decoder_rnn_forward.3} parent=5 // pred_region
        %s152 = ssub.s32 %s9, 1
        // Predicated region
        $region13: #{decoder_rnn_forward.3} parent=11 // pred_check
          %p153 = pneg %p56
        $region14: #{decoder_rnn_forward.3} parent=11 // pred_check_branch
          %155 = sbr.rel (%p153) target = $region16
        $region15: #{decoder_rnn_forward.3} parent=11 // pred_region
          %s156 = smul.u32 8, %s19
          %p157 = scmp.lt.s32.totalorder %s156, 7
          %s158 = scalar_select %p157, %s156, 7
          %p159 = scmp.lt.s32.totalorder %s21, 0
          %s160 = scalar_select %p159, %s21, 0
          %s161 = sadd.s32 %s160, %s158
          %s162 = smul.addr %s161, 4
          %s163 = scalar_lea.vmem %s0, %s162
          %s164 = smul.u32 8, %s19
        $region16: #{decoder_rnn_forward.3} parent=11 // pred_fallthru
          _
      $region12: #{decoder_rnn_forward.3} parent=5 // pred_fallthru
        _
      %p165 = scmp.lt.s32.totalorder %s9, 3
      // Predicated region
      $region17: #{decoder_rnn_forward.3} parent=5 // pred_check
        %p166 = pneg %p165
      $region18: #{decoder_rnn_forward.3} parent=5 // pred_check_branch
        %168 = sbr.rel (%p166) target = $region20
      $region19: #{decoder_rnn_forward.3} parent=5 // pred_region
        // Predicated region
        $region21: #{decoder_rnn_forward.3} parent=19 // pred_check
          %p169 = pneg %p78
        $region22: #{decoder_rnn_forward.3} parent=19 // pred_check_branch
          %171 = sbr.rel (%p169) target = $region24
        $region23: #{decoder_rnn_forward.3} parent=19 // pred_region
          %s172 = sand.u32 %s68, 1
          %s173 = sand.u32 %s68, 1
          %s174 = smul.addr %s173, 16
          %s175 = scalar_lea.vmem [#allocation3], %s174
          %s176 = smul.u32 4, %s18
          %s177 = smul.addr %s176, 3
          %s178 = sadd.s32 %s17, %s177
          %s179 = smul.addr %s178, 4
          %s180 = scalar_lea.vmem %s1, %s179
          // Predicated region
          $region25: #{decoder_rnn_forward.3} parent=23 // pred_check
            _
          $region26: #{decoder_rnn_forward.3} parent=23 // pred_check_branch
            %182 = sbr.rel (0) target = $region28
          $region27: #{decoder_rnn_forward.3} parent=23 // pred_region
            // Predicated region
            $region29: #{decoder_rnn_forward.3} parent=27 // pred_check
              _
            $region30: #{decoder_rnn_forward.3} parent=27 // pred_check_branch
              %184 = sbr.rel target = $region32
            $region31: #{decoder_rnn_forward.3} parent=27 // pred_region
              // Predicated region
              $region44: #{decoder_rnn_forward.3} parent=31 // pred_check
                _
              $region45: #{decoder_rnn_forward.3} parent=31 // pred_check_branch
                %206 = sbr.rel (0) target = $region47
              $region46: #{decoder_rnn_forward.3} parent=31 // pred_region
                loop: start=0, step=1, limit=1
                $region48: #{decoder_rnn_forward.3} parent=46 // loop_pre_header
                  _
                $region49: #{decoder_rnn_forward.3} parent=46 // loop_header
                  %s208 = sphi 0, %s212
                  %p209 = scmp.ge.s32.totalorder %s208, 1
                  %s213 = sphi %s180, %s180
                  %s214 = sphi %s175, %s175
                $region50: #{decoder_rnn_forward.3} parent=46 // loop_header_branch
                  %211 = sbr.rel (%p209) target = $region54
                $region51: #{decoder_rnn_forward.3} parent=46 // loop_body
                  _
                $region52: #{decoder_rnn_forward.3} parent=46 // loop_footer
                  %s212 = sadd.s32 1, %s208
                $region53: #{decoder_rnn_forward.3} parent=46 // loop_footer_branch
                  %207 = sbr.rel target = $region49
                $region54: #{decoder_rnn_forward.3} parent=46 // loop_exit
                  _
                %s216 = ssub.s32 16, 1
                loop: start=0, step=1, limit=1
                $region55: #{decoder_rnn_forward.3} parent=46 // loop_pre_header
                  _
                $region56: #{decoder_rnn_forward.3} parent=46 // loop_header
                  %s218 = sphi 0, %s222
                  %p219 = scmp.ge.s32.totalorder %s218, 1
                  %s223 = sphi %s180, %s180
                  %s224 = sphi %s175, %s175
                $region57: #{decoder_rnn_forward.3} parent=46 // loop_header_branch
                  %221 = sbr.rel (%p219) target = $region61
                $region58: #{decoder_rnn_forward.3} parent=46 // loop_body
                  %v225 = vld [vmem:[%s223] sm:%s216]
                  %226 = vst [vmem:[%s224] sm:%s216] %v225
                  %v227 = vld [vmem:[%s223 + $0xc] sm:%s216]
                  %228 = vst [vmem:[%s224 + $0x4] sm:%s216] %v227
                  %v229 = vld [vmem:[%s223 + $0x18] sm:%s216]
                  %230 = vst [vmem:[%s224 + $0x8] sm:%s216] %v229
                  %v231 = vld [vmem:[%s223 + $0x24] sm:%s216]
                  %232 = vst [vmem:[%s224 + $0xc] sm:%s216] %v231
                $region59: #{decoder_rnn_forward.3} parent=46 // loop_footer
                  %s222 = sadd.s32 1, %s218
                $region60: #{decoder_rnn_forward.3} parent=46 // loop_footer_branch
                  %217 = sbr.rel target = $region56
                $region61: #{decoder_rnn_forward.3} parent=46 // loop_exit
                  _
              $region47: #{decoder_rnn_forward.3} parent=31 // pred_fallthru
                _
            $region32: #{decoder_rnn_forward.3} parent=27 // pred_fallthru
              _
            // Predicated region
            $region33: #{decoder_rnn_forward.3} parent=27 // pred_check
              _
            $region34: #{decoder_rnn_forward.3} parent=27 // pred_check_branch
              %186 = sbr.rel (0) target = $region36
            $region35: #{decoder_rnn_forward.3} parent=27 // pred_region
              %s188 = ssub.s32 16, 1
              loop: start=0, step=1, limit=1
              $region37: #{decoder_rnn_forward.3} parent=35 // loop_pre_header
                _
              $region38: #{decoder_rnn_forward.3} parent=35 // loop_header
                %s190 = sphi 0, %s194
                %p191 = scmp.ge.s32.totalorder %s190, 1
                %s195 = sphi %s180, %s180
                %s196 = sphi %s175, %s175
              $region39: #{decoder_rnn_forward.3} parent=35 // loop_header_branch
                %193 = sbr.rel (%p191) target = $region43
              $region40: #{decoder_rnn_forward.3} parent=35 // loop_body
                %v197 = vld [vmem:[%s195] sm:%s188]
                %198 = vst [vmem:[%s196] sm:%s188] %v197
                %v199 = vld [vmem:[%s195 + $0xc] sm:%s188]
                %200 = vst [vmem:[%s196 + $0x4] sm:%s188] %v199
                %v201 = vld [vmem:[%s195 + $0x18] sm:%s188]
                %202 = vst [vmem:[%s196 + $0x8] sm:%s188] %v201
                %v203 = vld [vmem:[%s195 + $0x24] sm:%s188]
                %204 = vst [vmem:[%s196 + $0xc] sm:%s188] %v203
              $region41: #{decoder_rnn_forward.3} parent=35 // loop_footer
                %s194 = sadd.s32 1, %s190
              $region42: #{decoder_rnn_forward.3} parent=35 // loop_footer_branch
                %189 = sbr.rel target = $region38
              $region43: #{decoder_rnn_forward.3} parent=35 // loop_exit
                _
            $region36: #{decoder_rnn_forward.3} parent=27 // pred_fallthru
              _
          $region28: #{decoder_rnn_forward.3} parent=23 // pred_fallthru
            _
          %233 = vnop
        $region24: #{decoder_rnn_forward.3} parent=19 // pred_fallthru
          _
        // Predicated region
        $region62: #{decoder_rnn_forward.3} parent=19 // pred_check
          %p234 = pneg %p104
        $region63: #{decoder_rnn_forward.3} parent=19 // pred_check_branch
          %236 = sbr.rel (%p234) target = $region65
        $region64: #{decoder_rnn_forward.3} parent=19 // pred_region
          %p237 = scmp.lt.s32.totalorder %s17, 2
          %s238 = scalar_select %p237, %s17, 2
          %s239 = scalar_lea.vmem %s2, %s238
        $region65: #{decoder_rnn_forward.3} parent=19 // pred_fallthru
          _
      $region20: #{decoder_rnn_forward.3} parent=5 // pred_fallthru
        _
      %p240 = scmp.le.s32.totalorder 1, %s9
      %p241 = scmp.lt.s32.totalorder %s9, 4
      %p242 = pnand %p240, %p241
      %p243 = pneg %p242
      // Predicated region
      $region66: #{decoder_rnn_forward.3} parent=5 // pred_check
        _
      $region67: #{decoder_rnn_forward.3} parent=5 // pred_check_branch
        %245 = sbr.rel (%p242) target = $region69
      $region68: #{decoder_rnn_forward.3} parent=5 // pred_region
        %s246 = ssub.s32 %s9, 1
        %s247 = sand.u32 %s71, 1
        %s248 = sand.u32 %s71, 1
        %s249 = smul.addr %s248, 16
        %s250 = scalar_lea.vmem [#allocation3], %s249
        // Predicated region
        $region70: #{decoder_rnn_forward.3} parent=68 // pred_check
          %p251 = pneg %p84
        $region71: #{decoder_rnn_forward.3} parent=68 // pred_check_branch
          %253 = sbr.rel (%p251) target = $region73
        $region72: #{decoder_rnn_forward.3} parent=68 // pred_region
          _
        $region73: #{decoder_rnn_forward.3} parent=68 // pred_fallthru
          _
        %s254 = smul.u32 8, %s19
        %p255 = scmp.lt.s32.totalorder %s254, 7
        %s256 = scalar_select %p255, %s254, 7
        %p257 = scmp.lt.s32.totalorder %s21, 0
        %s258 = scalar_select %p257, %s21, 0
        %s259 = sadd.s32 %s258, %s256
        %s260 = smul.addr %s259, 4
        %s261 = scalar_lea.vmem %s0, %s260
        %p262 = pneg %p56
        %p263 = pneg %p53
        %s264 = sand.u32 %s71, 1
        %s265 = sand.u32 %s71, 1
        %s266 = smul.addr %s265, 16
        %s267 = scalar_lea.vmem [#allocation3], %s266
        %p268 = pneg %p84
        %p269 = pneg %p81
        %p270 = scmp.lt.s32.totalorder %s20, 2
        %s271 = scalar_select %p270, %s20, 2
        %s272 = scalar_lea.vmem %s2, %s271
        %p273 = pneg %p110
        %p274 = pneg %p107
        %p275 = pneg %p138
        %p276 = pneg %p135
        %s277 = sand.u32 %s125, 1
        %s278 = sand.u32 %s125, 1
        %s279 = smul.addr %s278, 64
        %s280 = scalar_lea.vmem [#allocation4], %s279
        %s281 = smul.u32 8, %s19
        %p282 = scmp.lt.s32.totalorder %s281, 7
        %s283 = scalar_select %p282, %s281, 7
        %p284 = scmp.lt.s32.totalorder %s21, 0
        %s285 = scalar_select %p284, %s21, 0
        %s286 = sadd.s32 %s285, %s283
        %s287 = smul.addr %s286, 4
        %s288 = scalar_lea.vmem %s0, %s287
        %s289 = smul.u32 8, %s19
        %s290 = smul.u32 4, %s21
        %p291 = scmp.lt.s32.totalorder %s20, 2
        %s292 = scalar_select %p291, %s20, 2
        %s293 = scalar_lea.vmem %s2, %s292
        %s294 = smul.u32 8, %s19
        %p296 = scmp.eq.s32.totalorder %s21, 0
        // Predicated region
        $region74: #{decoder_rnn_forward.3} parent=68 // pred_check
          %p297 = pneg %p296
        $region75: #{decoder_rnn_forward.3} parent=68 // pred_check_branch
          %299 = sbr.rel (%p297) target = $region77
        $region76: #{decoder_rnn_forward.3} parent=68 // pred_region
          %300 = vst [vmem:[#allocation2] sm:$0xff] 0.0
          %301 = vst [vmem:[#allocation2 + $0x8] sm:$0xff] 0.0
          %302 = vst [vmem:[#allocation2 + $0x10] sm:$0xff] 0.0
          %303 = vst [vmem:[#allocation2 + $0x18] sm:$0xff] 0.0
          %304 = vst [vmem:[#allocation2 + $0x20] sm:$0xff] 0.0
          %305 = vst [vmem:[#allocation2 + $0x28] sm:$0xff] 0.0
          %306 = vst [vmem:[#allocation2 + $0x30] sm:$0xff] 0.0
          %307 = vst [vmem:[#allocation2 + $0x38] sm:$0xff] 0.0
        $region77: #{decoder_rnn_forward.3} parent=68 // pred_fallthru
          _
        %v308 = vld [vmem:[#allocation2] sm:$0xff]
        %v309 = vld [vmem:[#allocation2 + $0x8] sm:$0xff]
        %v310 = vld [vmem:[#allocation2 + $0x10] sm:$0xff]
        %v311 = vld [vmem:[#allocation2 + $0x18] sm:$0xff]
        %v312 = vld [vmem:[#allocation2 + $0x20] sm:$0xff]
        %v313 = vld [vmem:[#allocation2 + $0x28] sm:$0xff]
        %v314 = vld [vmem:[#allocation2 + $0x30] sm:$0xff]
        %v315 = vld [vmem:[#allocation2 + $0x38] sm:$0xff]
        %v316 = vld [vmem:[%s288] sm:$0xf]
        %v317 = vld [vmem:[%s288 + $0x4] sm:$0xf]
        %v318 = vld [vmem:[%s288 + $0x8] sm:$0xf]
        %v319 = vld [vmem:[%s288 + $0xc] sm:$0xf]
        %v320 = vld [vmem:[%s288 + $0x10] sm:$0xf]
        %v321 = vld [vmem:[%s288 + $0x14] sm:$0xf]
        %v322 = vld [vmem:[%s288 + $0x18] sm:$0xf]
        %v323 = vld [vmem:[%s288 + $0x1c] sm:$0xf]
        %v324 = vld [vmem:[%s250] sm:$0xf]
        %v325 = vld [vmem:[%s250 + $0x4] sm:$0xf]
        %v326 = vld [vmem:[%s250 + $0x8] sm:$0xf]
        %v327 = vld [vmem:[%s250 + $0xc] sm:$0xf]
        %v336 = vunpack.c.l.b16 %v316
        %v337 = vunpack.c.l.b16 %v317
        %v338 = vunpack.c.l.b16 %v318
        %v339 = vunpack.c.l.b16 %v319
        %v340 = vunpack.c.l.b16 %v320
        %v341 = vunpack.c.l.b16 %v321
        %v342 = vunpack.c.l.b16 %v322
        %v343 = vunpack.c.l.b16 %v323
        %v344 = vpack.c.b16 %v337, %v336
        %v345 = vpack.c.b16 %v339, %v338
        %v346 = vpack.c.b16 %v341, %v340
        %v347 = vpack.c.b16 %v343, %v342
        %v352 = vunpack.c.l.b16 %v324
        %v353 = vunpack.c.l.b16 %v325
        %v354 = vunpack.c.l.b16 %v326
        %v355 = vunpack.c.l.b16 %v327
        %v356 = vpack.c.b16 %v353, %v352
        %v357 = vpack.c.b16 %v355, %v354
        %vm360 = vcmask 261120
        %v362 = vsel %vm360, %v344, 0
        %v365 = vsel %vm360, %v345, 0
        %v368 = vsel %vm360, %v346, 0
        %v371 = vsel %vm360, %v347, 0
        %373 = vmatpush.bf16.msra.mxu0 0
        %374 = vmatpush.bf16.msra.mxu0 0
        %375 = vmatpush.bf16.msra.mxu0 0
        %376 = vmatpush.bf16.msra.mxu0 0
        %377 = vmatpush.bf16.msra.mxu0 0
        %378 = vmatpush.bf16.msra.mxu0 0
        %379 = vmatpush.bf16.msra.mxu0 %v357
        %380 = vmatpush.bf16.msra.mxu0 %v356
        %381 = vmatmul.bf16.gmra.mxu0 %v362
        %v382 = vpop.f32.mrf.mxu0
        %v383 = vadd.f32 0.0, %v382
        %v384 = vpop.f32.mrf.mxu0
        %v385 = vadd.f32 0.0, %v384
        %386 = vmatmul.bf16.gmra.mxu0 %v365
        %v387 = vpop.f32.mrf.mxu0
        %v388 = vadd.f32 0.0, %v387
        %v389 = vpop.f32.mrf.mxu0
        %v390 = vadd.f32 0.0, %v389
        %391 = vmatmul.bf16.gmra.mxu0 %v368
        %v392 = vpop.f32.mrf.mxu0
        %v393 = vadd.f32 0.0, %v392
        %v394 = vpop.f32.mrf.mxu0
        %v395 = vadd.f32 0.0, %v394
        %396 = vmatmul.bf16.gmra.mxu0 %v371
        %v397 = vpop.f32.mrf.mxu0
        %v398 = vadd.f32 0.0, %v397
        %v399 = vpop.f32.mrf.mxu0
        %v400 = vadd.f32 0.0, %v399
        %401 = vdwg.mxu0
        %v402 = vadd.f32 %v308, %v383
        %v403 = vadd.f32 %v309, %v385
        %v404 = vadd.f32 %v310, %v388
        %v405 = vadd.f32 %v311, %v390
        %v406 = vadd.f32 %v312, %v393
        %v407 = vadd.f32 %v313, %v395
        %v408 = vadd.f32 %v314, %v398
        %v409 = vadd.f32 %v315, %v400
        %410 = vst [vmem:[#allocation2] sm:$0xff] %v402
        %411 = vst [vmem:[#allocation2 + $0x8] sm:$0xff] %v403
        %412 = vst [vmem:[#allocation2 + $0x10] sm:$0xff] %v404
        %413 = vst [vmem:[#allocation2 + $0x18] sm:$0xff] %v405
        %414 = vst [vmem:[#allocation2 + $0x20] sm:$0xff] %v406
        %415 = vst [vmem:[#allocation2 + $0x28] sm:$0xff] %v407
        %416 = vst [vmem:[#allocation2 + $0x30] sm:$0xff] %v408
        %417 = vst [vmem:[#allocation2 + $0x38] sm:$0xff] %v409
        // Predicated region
        $region78: #{decoder_rnn_forward.3} parent=68 // pred_check
          %p418 = pneg %p296
        $region79: #{decoder_rnn_forward.3} parent=68 // pred_check_branch
          %420 = sbr.rel (%p418) target = $region81
        $region80: #{decoder_rnn_forward.3} parent=68 // pred_region
          %v421 = vld [vmem:[#allocation2] sm:$0xff]
          %v422 = vld [vmem:[#allocation2 + $0x8] sm:$0xff]
          %v423 = vld [vmem:[#allocation2 + $0x10] sm:$0xff]
          %v424 = vld [vmem:[#allocation2 + $0x18] sm:$0xff]
          %v425 = vld [vmem:[#allocation2 + $0x20] sm:$0xff]
          %v426 = vld [vmem:[#allocation2 + $0x28] sm:$0xff]
          %v427 = vld [vmem:[#allocation2 + $0x30] sm:$0xff]
          %v428 = vld [vmem:[#allocation2 + $0x38] sm:$0xff]
          %v429 = vld [vmem:[%s293] sm:$0x1]
          %v431 = vperm.slane %v429, 0
          %v433 = vadd.f32 %v421, %v431
          %v434 = vadd.f32 %v422, %v431
          %v435 = vadd.f32 %v423, %v431
          %v436 = vadd.f32 %v424, %v431
          %v437 = vadd.f32 %v425, %v431
          %v438 = vadd.f32 %v426, %v431
          %v439 = vadd.f32 %v427, %v431
          %v440 = vadd.f32 %v428, %v431
          %441 = vst [vmem:[%s280] sm:$0xff] %v433
          %442 = vst [vmem:[%s280 + $0x8] sm:$0xff] %v434
          %443 = vst [vmem:[%s280 + $0x10] sm:$0xff] %v435
          %444 = vst [vmem:[%s280 + $0x18] sm:$0xff] %v436
          %445 = vst [vmem:[%s280 + $0x20] sm:$0xff] %v437
          %446 = vst [vmem:[%s280 + $0x28] sm:$0xff] %v438
          %447 = vst [vmem:[%s280 + $0x30] sm:$0xff] %v439
          %448 = vst [vmem:[%s280 + $0x38] sm:$0xff] %v440
        $region81: #{decoder_rnn_forward.3} parent=68 // pred_fallthru
          _
        %s449 = sand.u32 %s125, 1
        %s450 = sand.u32 %s125, 1
        %s451 = smul.addr %s450, 64
        %s452 = scalar_lea.vmem [#allocation4], %s451
        // Predicated region
        $region82: #{decoder_rnn_forward.3} parent=68 // pred_check
          %p453 = pneg %p135
        $region83: #{decoder_rnn_forward.3} parent=68 // pred_check_branch
          %455 = sbr.rel (%p453) target = $region85
        $region84: #{decoder_rnn_forward.3} parent=68 // pred_region
          %s456 = smul.u32 8, %s19
          %s457 = smul.addr %s456, 3
          %s458 = sadd.s32 %s20, %s457
          %s459 = smul.addr %s458, 8
          %s460 = scalar_lea.vmem %s3, %s459
          // Predicated region
          $region86: #{decoder_rnn_forward.3} parent=84 // pred_check
            _
          $region87: #{decoder_rnn_forward.3} parent=84 // pred_check_branch
            %462 = sbr.rel (0) target = $region89
          $region88: #{decoder_rnn_forward.3} parent=84 // pred_region
            // Predicated region
            $region90: #{decoder_rnn_forward.3} parent=88 // pred_check
              _
            $region91: #{decoder_rnn_forward.3} parent=88 // pred_check_branch
              %464 = sbr.rel (0) target = $region93
            $region92: #{decoder_rnn_forward.3} parent=88 // pred_region
              // Predicated region
              $region105: #{decoder_rnn_forward.3} parent=92 // pred_check
                _
              $region106: #{decoder_rnn_forward.3} parent=92 // pred_check_branch
                %494 = sbr.rel (0) target = $region108
              $region107: #{decoder_rnn_forward.3} parent=92 // pred_region
                loop: start=0, step=1, limit=1
                $region109: #{decoder_rnn_forward.3} parent=107 // loop_pre_header
                  _
                $region110: #{decoder_rnn_forward.3} parent=107 // loop_header
                  %s496 = sphi 0, %s500
                  %p497 = scmp.ge.s32.totalorder %s496, 1
                  %s501 = sphi %s452, %s452
                  %s502 = sphi %s460, %s460
                $region111: #{decoder_rnn_forward.3} parent=107 // loop_header_branch
                  %499 = sbr.rel (%p497) target = $region115
                $region112: #{decoder_rnn_forward.3} parent=107 // loop_body
                  %v503 = vld [vmem:[%s501] sm:$0xff]
                  %504 = vst [vmem:[%s502] sm:$0xff] %v503
                  %v505 = vld [vmem:[%s501 + $0x8] sm:$0xff]
                  %506 = vst [vmem:[%s502 + $0x18] sm:$0xff] %v505
                  %v507 = vld [vmem:[%s501 + $0x10] sm:$0xff]
                  %508 = vst [vmem:[%s502 + $0x30] sm:$0xff] %v507
                  %v509 = vld [vmem:[%s501 + $0x18] sm:$0xff]
                  %510 = vst [vmem:[%s502 + $0x48] sm:$0xff] %v509
                  %v511 = vld [vmem:[%s501 + $0x20] sm:$0xff]
                  %512 = vst [vmem:[%s502 + $0x60] sm:$0xff] %v511
                  %v513 = vld [vmem:[%s501 + $0x28] sm:$0xff]
                  %514 = vst [vmem:[%s502 + $0x78] sm:$0xff] %v513
                  %v515 = vld [vmem:[%s501 + $0x30] sm:$0xff]
                  %516 = vst [vmem:[%s502 + $0x90] sm:$0xff] %v515
                  %v517 = vld [vmem:[%s501 + $0x38] sm:$0xff]
                  %518 = vst [vmem:[%s502 + $0xa8] sm:$0xff] %v517
                $region113: #{decoder_rnn_forward.3} parent=107 // loop_footer
                  %s500 = sadd.s32 1, %s496
                $region114: #{decoder_rnn_forward.3} parent=107 // loop_footer_branch
                  %495 = sbr.rel target = $region110
                $region115: #{decoder_rnn_forward.3} parent=107 // loop_exit
                  _
              $region108: #{decoder_rnn_forward.3} parent=92 // pred_fallthru
                _
              // Predicated region
              $region116: #{decoder_rnn_forward.3} parent=92 // pred_check
                _
              $region117: #{decoder_rnn_forward.3} parent=92 // pred_check_branch
                %520 = sbr.rel target = $region119
              $region118: #{decoder_rnn_forward.3} parent=92 // pred_region
                _
              $region119: #{decoder_rnn_forward.3} parent=92 // pred_fallthru
                _
            $region93: #{decoder_rnn_forward.3} parent=88 // pred_fallthru
              _
            // Predicated region
            $region94: #{decoder_rnn_forward.3} parent=88 // pred_check
              _
            $region95: #{decoder_rnn_forward.3} parent=88 // pred_check_branch
              %466 = sbr.rel target = $region97
            $region96: #{decoder_rnn_forward.3} parent=88 // pred_region
              %s468 = ssub.s32 256, 1
              loop: start=0, step=1, limit=1
              $region98: #{decoder_rnn_forward.3} parent=96 // loop_pre_header
                _
              $region99: #{decoder_rnn_forward.3} parent=96 // loop_header
                %s470 = sphi 0, %s474
                %p471 = scmp.ge.s32.totalorder %s470, 1
                %s475 = sphi %s452, %s452
                %s476 = sphi %s460, %s460
              $region100: #{decoder_rnn_forward.3} parent=96 // loop_header_branch
                %473 = sbr.rel (%p471) target = $region104
              $region101: #{decoder_rnn_forward.3} parent=96 // loop_body
                %v477 = vld [vmem:[%s475] sm:%s468]
                %478 = vst [vmem:[%s476] sm:%s468] %v477
                %v479 = vld [vmem:[%s475 + $0x8] sm:%s468]
                %480 = vst [vmem:[%s476 + $0x18] sm:%s468] %v479
                %v481 = vld [vmem:[%s475 + $0x10] sm:%s468]
                %482 = vst [vmem:[%s476 + $0x30] sm:%s468] %v481
                %v483 = vld [vmem:[%s475 + $0x18] sm:%s468]
                %484 = vst [vmem:[%s476 + $0x48] sm:%s468] %v483
                %v485 = vld [vmem:[%s475 + $0x20] sm:%s468]
                %486 = vst [vmem:[%s476 + $0x60] sm:%s468] %v485
                %v487 = vld [vmem:[%s475 + $0x28] sm:%s468]
                %488 = vst [vmem:[%s476 + $0x78] sm:%s468] %v487
                %v489 = vld [vmem:[%s475 + $0x30] sm:%s468]
                %490 = vst [vmem:[%s476 + $0x90] sm:%s468] %v489
                %v491 = vld [vmem:[%s475 + $0x38] sm:%s468]
                %492 = vst [vmem:[%s476 + $0xa8] sm:%s468] %v491
              $region102: #{decoder_rnn_forward.3} parent=96 // loop_footer
                %s474 = sadd.s32 1, %s470
              $region103: #{decoder_rnn_forward.3} parent=96 // loop_footer_branch
                %469 = sbr.rel target = $region99
              $region104: #{decoder_rnn_forward.3} parent=96 // loop_exit
                _
            $region97: #{decoder_rnn_forward.3} parent=88 // pred_fallthru
              _
          $region89: #{decoder_rnn_forward.3} parent=84 // pred_fallthru
            _
          %521 = vnop
        $region85: #{decoder_rnn_forward.3} parent=68 // pred_fallthru
          _
      $region69: #{decoder_rnn_forward.3} parent=5 // pred_fallthru
        _
      %p522 = scmp.le.s32.totalorder 2, %s9
      // Predicated region
      $region120: #{decoder_rnn_forward.3} parent=5 // pred_check
        %p523 = pneg %p522
      $region121: #{decoder_rnn_forward.3} parent=5 // pred_check_branch
        %525 = sbr.rel (%p523) target = $region123
      $region122: #{decoder_rnn_forward.3} parent=5 // pred_region
        %s526 = ssub.s32 %s9, 2
        // Predicated region
        $region124: #{decoder_rnn_forward.3} parent=122 // pred_check
          %p527 = pneg %p141
        $region125: #{decoder_rnn_forward.3} parent=122 // pred_check_branch
          %529 = sbr.rel (%p527) target = $region127
        $region126: #{decoder_rnn_forward.3} parent=122 // pred_region
          %s530 = sand.u32 %s126, 1
          %s531 = sand.u32 %s126, 1
          %s532 = smul.addr %s531, 64
          %s533 = scalar_lea.vmem [#allocation4], %s532
        $region127: #{decoder_rnn_forward.3} parent=122 // pred_fallthru
          _
      $region123: #{decoder_rnn_forward.3} parent=5 // pred_fallthru
        _
    $region6: #{decoder_rnn_forward.3} parent=1 // loop_footer
      %s13 = sadd.s32 1, %s9
    $region7: #{decoder_rnn_forward.3} parent=1 // loop_footer_branch
      %8 = sbr.rel target = $region3
    $region8: #{decoder_rnn_forward.3} parent=1 // loop_exit
      _

// kernel: decoder_rnn_forward.5
$region0: #{decoder_rnn_forward.5}
  #allocation0 [shape = 'u32[]', space=smem, size = 0x4, offset = 0x4, fixed_abs, tag = 'smem constant byte address 0x4 - core index']
  #allocation1 [shape = 'u32[72,128]{1,0:T(1,128)}', space=vmem, size = 0x9000, scoped, tag = 'internal scratch']
  #allocation2 [shape = 'f32[64,128]{1,0:T(8,128)}', space=vmem, size = 0x8000, scoped, tag = 'scratch operand']
  %s0 = inlined_call_operand.vmem [shape: bf16[64,128], index: 0, kind: input, shape index: {}]
  %s1 = inlined_call_operand.vmem [shape: bf16[128,128], index: 1, kind: input, shape index: {}]
  %s2 = inlined_call_operand.vmem [shape: f32[1,128], index: 2, kind: input, shape index: {}]
  %s3 = inlined_call_operand.vmem [shape: f32[64,128], index: 3, kind: output, shape index: {}]
  %s4 = sld [smem:[#allocation0]]
  $region30: #{decoder_rnn_forward.5} parent=0
    _
  %s6 = ssub.s32 1, %s4
  %s7 = scalar_select 0, %s6, %s4
  // Predicated region
  $region2: #{decoder_rnn_forward.5} parent=0 // pred_check
    _
  $region3: #{decoder_rnn_forward.5} parent=0 // pred_check_branch
    %9 = sbr.rel (0) target = $region5
  $region4: #{decoder_rnn_forward.5} parent=0 // pred_region
    _
  $region5: #{decoder_rnn_forward.5} parent=0 // pred_fallthru
    _
  // Predicated region
  $region6: #{decoder_rnn_forward.5} parent=0 // pred_check
    _
  $region7: #{decoder_rnn_forward.5} parent=0 // pred_check_branch
    %11 = sbr.rel (0) target = $region9
  $region8: #{decoder_rnn_forward.5} parent=0 // pred_region
    _
  $region9: #{decoder_rnn_forward.5} parent=0 // pred_fallthru
    _
  // Predicated region
  $region10: #{decoder_rnn_forward.5} parent=0 // pred_check
    _
  $region11: #{decoder_rnn_forward.5} parent=0 // pred_check_branch
    %13 = sbr.rel (0) target = $region13
  $region12: #{decoder_rnn_forward.5} parent=0 // pred_region
    _
  $region13: #{decoder_rnn_forward.5} parent=0 // pred_fallthru
    _
  %p14 = scmp.eq.s32.totalorder 0, 0
  // Predicated region
  $region14: #{decoder_rnn_forward.5} parent=0 // pred_check
    %p15 = pneg %p14
  $region15: #{decoder_rnn_forward.5} parent=0 // pred_check_branch
    %17 = sbr.rel (%p15) target = $region17
  $region16: #{decoder_rnn_forward.5} parent=0 // pred_region
    %18 = vst [vmem:[#allocation2] sm:$0xff] 0.0
    %19 = vst [vmem:[#allocation2 + $0x8] sm:$0xff] 0.0
    %20 = vst [vmem:[#allocation2 + $0x10] sm:$0xff] 0.0
    %21 = vst [vmem:[#allocation2 + $0x18] sm:$0xff] 0.0
    %22 = vst [vmem:[#allocation2 + $0x20] sm:$0xff] 0.0
    %23 = vst [vmem:[#allocation2 + $0x28] sm:$0xff] 0.0
    %24 = vst [vmem:[#allocation2 + $0x30] sm:$0xff] 0.0
    %25 = vst [vmem:[#allocation2 + $0x38] sm:$0xff] 0.0
  $region17: #{decoder_rnn_forward.5} parent=0 // pred_fallthru
    _
  %v26 = vld [vmem:[#allocation2] sm:$0xff]
  %v27 = vld [vmem:[#allocation2 + $0x8] sm:$0xff]
  %v28 = vld [vmem:[#allocation2 + $0x10] sm:$0xff]
  %v29 = vld [vmem:[#allocation2 + $0x18] sm:$0xff]
  %v30 = vld [vmem:[#allocation2 + $0x20] sm:$0xff]
  %v31 = vld [vmem:[#allocation2 + $0x28] sm:$0xff]
  %v32 = vld [vmem:[#allocation2 + $0x30] sm:$0xff]
  %v33 = vld [vmem:[#allocation2 + $0x38] sm:$0xff]
  %v34 = vld [vmem:[%s0] sm:$0xf]
  %v35 = vld [vmem:[%s0 + $0x4] sm:$0xf]
  %v36 = vld [vmem:[%s0 + $0x8] sm:$0xf]
  %v37 = vld [vmem:[%s0 + $0xc] sm:$0xf]
  %v38 = vld [vmem:[%s0 + $0x10] sm:$0xf]
  %v39 = vld [vmem:[%s0 + $0x14] sm:$0xf]
  %v40 = vld [vmem:[%s0 + $0x18] sm:$0xf]
  %v41 = vld [vmem:[%s0 + $0x1c] sm:$0xf]
  %v42 = vld [vmem:[%s1] sm:$0xf]
  %v43 = vld [vmem:[%s1 + $0x4] sm:$0xf]
  %v44 = vld [vmem:[%s1 + $0x8] sm:$0xf]
  %v45 = vld [vmem:[%s1 + $0xc] sm:$0xf]
  %v46 = vld [vmem:[%s1 + $0x10] sm:$0xf]
  %v47 = vld [vmem:[%s1 + $0x14] sm:$0xf]
  %v48 = vld [vmem:[%s1 + $0x18] sm:$0xf]
  %v49 = vld [vmem:[%s1 + $0x1c] sm:$0xf]
  %v50 = vld [vmem:[%s1 + $0x20] sm:$0xf]
  %v51 = vld [vmem:[%s1 + $0x24] sm:$0xf]
  %v52 = vld [vmem:[%s1 + $0x28] sm:$0xf]
  %v53 = vld [vmem:[%s1 + $0x2c] sm:$0xf]
  %v54 = vld [vmem:[%s1 + $0x30] sm:$0xf]
  %v55 = vld [vmem:[%s1 + $0x34] sm:$0xf]
  %v56 = vld [vmem:[%s1 + $0x38] sm:$0xf]
  %v57 = vld [vmem:[%s1 + $0x3c] sm:$0xf]
  %v66 = vunpack.c.l.b16 %v34
  %v67 = vunpack.c.l.b16 %v35
  %v68 = vunpack.c.l.b16 %v36
  %v69 = vunpack.c.l.b16 %v37
  %v70 = vunpack.c.l.b16 %v38
  %v71 = vunpack.c.l.b16 %v39
  %v72 = vunpack.c.l.b16 %v40
  %v73 = vunpack.c.l.b16 %v41
  %v74 = vpack.c.b16 %v67, %v66
  %v75 = vpack.c.b16 %v69, %v68
  %v76 = vpack.c.b16 %v71, %v70
  %v77 = vpack.c.b16 %v73, %v72
  %v98 = vunpack.c.l.b16 %v42
  %v99 = vunpack.c.l.b16 %v43
  %v100 = vunpack.c.l.b16 %v44
  %v101 = vunpack.c.l.b16 %v45
  %v102 = vunpack.c.l.b16 %v46
  %v103 = vunpack.c.l.b16 %v47
  %v104 = vunpack.c.l.b16 %v48
  %v105 = vunpack.c.l.b16 %v49
  %v106 = vunpack.c.l.b16 %v50
  %v107 = vunpack.c.l.b16 %v51
  %v108 = vunpack.c.l.b16 %v52
  %v109 = vunpack.c.l.b16 %v53
  %v110 = vunpack.c.l.b16 %v54
  %v111 = vunpack.c.l.b16 %v55
  %v112 = vunpack.c.l.b16 %v56
  %v113 = vunpack.c.l.b16 %v57
  %v114 = vpack.c.b16 %v99, %v98
  %v115 = vpack.c.b16 %v101, %v100
  %v116 = vpack.c.b16 %v103, %v102
  %v117 = vpack.c.b16 %v105, %v104
  %v118 = vpack.c.b16 %v107, %v106
  %v119 = vpack.c.b16 %v109, %v108
  %v120 = vpack.c.b16 %v111, %v110
  %v121 = vpack.c.b16 %v113, %v112
  %130 = vmatpush.bf16.msra.mxu0 %v121
  %131 = vmatpush.bf16.msra.mxu0 %v120
  %132 = vmatpush.bf16.msra.mxu0 %v119
  %133 = vmatpush.bf16.msra.mxu0 %v118
  %134 = vmatpush.bf16.msra.mxu0 %v117
  %135 = vmatpush.bf16.msra.mxu0 %v116
  %136 = vmatpush.bf16.msra.mxu0 %v115
  %137 = vmatpush.bf16.msra.mxu0 %v114
  %138 = vmatmul.bf16.gmra.mxu0 %v74
  %v139 = vpop.f32.mrf.mxu0
  %v140 = vadd.f32 0.0, %v139
  %v141 = vpop.f32.mrf.mxu0
  %v142 = vadd.f32 0.0, %v141
  %143 = vmatmul.bf16.gmra.mxu0 %v75
  %v144 = vpop.f32.mrf.mxu0
  %v145 = vadd.f32 0.0, %v144
  %v146 = vpop.f32.mrf.mxu0
  %v147 = vadd.f32 0.0, %v146
  %148 = vmatmul.bf16.gmra.mxu0 %v76
  %v149 = vpop.f32.mrf.mxu0
  %v150 = vadd.f32 0.0, %v149
  %v151 = vpop.f32.mrf.mxu0
  %v152 = vadd.f32 0.0, %v151
  %153 = vmatmul.bf16.gmra.mxu0 %v77
  %v154 = vpop.f32.mrf.mxu0
  %v155 = vadd.f32 0.0, %v154
  %v156 = vpop.f32.mrf.mxu0
  %v157 = vadd.f32 0.0, %v156
  %158 = vdwg.mxu0
  %v159 = vadd.f32 %v26, %v140
  %v160 = vadd.f32 %v27, %v142
  %v161 = vadd.f32 %v28, %v145
  %v162 = vadd.f32 %v29, %v147
  %v163 = vadd.f32 %v30, %v150
  %v164 = vadd.f32 %v31, %v152
  %v165 = vadd.f32 %v32, %v155
  %v166 = vadd.f32 %v33, %v157
  %167 = vst [vmem:[#allocation2] sm:$0xff] %v159
  %168 = vst [vmem:[#allocation2 + $0x8] sm:$0xff] %v160
  %169 = vst [vmem:[#allocation2 + $0x10] sm:$0xff] %v161
  %170 = vst [vmem:[#allocation2 + $0x18] sm:$0xff] %v162
  %171 = vst [vmem:[#allocation2 + $0x20] sm:$0xff] %v163
  %172 = vst [vmem:[#allocation2 + $0x28] sm:$0xff] %v164
  %173 = vst [vmem:[#allocation2 + $0x30] sm:$0xff] %v165
  %174 = vst [vmem:[#allocation2 + $0x38] sm:$0xff] %v166
  // Predicated region
  $region18: #{decoder_rnn_forward.5} parent=0 // pred_check
    %p175 = pneg %p14
  $region19: #{decoder_rnn_forward.5} parent=0 // pred_check_branch
    %177 = sbr.rel (%p175) target = $region21
  $region20: #{decoder_rnn_forward.5} parent=0 // pred_region
    %v178 = vld [vmem:[#allocation2] sm:$0xff]
    %v179 = vld [vmem:[#allocation2 + $0x8] sm:$0xff]
    %v180 = vld [vmem:[#allocation2 + $0x10] sm:$0xff]
    %v181 = vld [vmem:[#allocation2 + $0x18] sm:$0xff]
    %v182 = vld [vmem:[#allocation2 + $0x20] sm:$0xff]
    %v183 = vld [vmem:[#allocation2 + $0x28] sm:$0xff]
    %v184 = vld [vmem:[#allocation2 + $0x30] sm:$0xff]
    %v185 = vld [vmem:[#allocation2 + $0x38] sm:$0xff]
    %v186 = vld [vmem:[%s2] sm:$0x1]
    %v188 = vperm.slane %v186, 0
    %v190 = vadd.f32 %v178, %v188
    %v191 = vadd.f32 %v179, %v188
    %v192 = vadd.f32 %v180, %v188
    %v193 = vadd.f32 %v181, %v188
    %v194 = vadd.f32 %v182, %v188
    %v195 = vadd.f32 %v183, %v188
    %v196 = vadd.f32 %v184, %v188
    %v197 = vadd.f32 %v185, %v188
    %198 = vst [vmem:[%s3] sm:$0xff] %v190
    %199 = vst [vmem:[%s3 + $0x8] sm:$0xff] %v191
    %200 = vst [vmem:[%s3 + $0x10] sm:$0xff] %v192
    %201 = vst [vmem:[%s3 + $0x18] sm:$0xff] %v193
    %202 = vst [vmem:[%s3 + $0x20] sm:$0xff] %v194
    %203 = vst [vmem:[%s3 + $0x28] sm:$0xff] %v195
    %204 = vst [vmem:[%s3 + $0x30] sm:$0xff] %v196
    %205 = vst [vmem:[%s3 + $0x38] sm:$0xff] %v197
  $region21: #{decoder_rnn_forward.5} parent=0 // pred_fallthru
    _
  // Predicated region
  $region22: #{decoder_rnn_forward.5} parent=0 // pred_check
    _
  $region23: #{decoder_rnn_forward.5} parent=0 // pred_check_branch
    %207 = sbr.rel (0) target = $region25
  $region24: #{decoder_rnn_forward.5} parent=0 // pred_region
    _
  $region25: #{decoder_rnn_forward.5} parent=0 // pred_fallthru
    _
  // Predicated region
  $region26: #{decoder_rnn_forward.5} parent=0 // pred_check
    _
  $region27: #{decoder_rnn_forward.5} parent=0 // pred_check_branch
    %209 = sbr.rel (0) target = $region29
  $region28: #{decoder_rnn_forward.5} parent=0 // pred_region
    _
  $region29: #{decoder_rnn_forward.5} parent=0 // pred_fallthru
    _

// kernel: decoder_rnn_forward.4
$region0: #{decoder_rnn_forward.4}
  #allocation0 [shape = 'u32[]', space=smem, size = 0x4, offset = 0x4, fixed_abs, tag = 'smem constant byte address 0x4 - core index']
  #allocation1 [shape = 'u32[72,128]{1,0:T(1,128)}', space=vmem, size = 0x9000, scoped, tag = 'internal scratch']
  #allocation2 [shape = 'f32[8,128]{1,0:T(8,128)}', space=vmem, size = 0x1000, scoped, tag = 'scratch operand']
  %s0 = inlined_call_operand.vmem [shape: f32[8,8,384], index: 0, kind: input, shape index: {}]
  %s1 = inlined_call_operand.vmem [shape: bf16[128,384], index: 1, kind: input, shape index: {}]
  %s2 = inlined_call_operand.vmem [shape: f32[1,384], index: 2, kind: input, shape index: {}]
  %s3 = inlined_call_operand.vmem [shape: f32[8,8,128], index: 3, kind: output, shape index: {}]
  %s4 = sld [smem:[#allocation0]]
  $region22: #{decoder_rnn_forward.4} parent=0
    _
  %s6 = ssub.s32 1, %s4
  %s7 = scalar_select 0, %s6, %s4
  // Predicated region
  $region2: #{decoder_rnn_forward.4} parent=0 // pred_check
    _
  $region3: #{decoder_rnn_forward.4} parent=0 // pred_check_branch
    %9 = sbr.rel (0) target = $region5
  $region4: #{decoder_rnn_forward.4} parent=0 // pred_region
    _
  $region5: #{decoder_rnn_forward.4} parent=0 // pred_fallthru
    _
  // Predicated region
  $region6: #{decoder_rnn_forward.4} parent=0 // pred_check
    _
  $region7: #{decoder_rnn_forward.4} parent=0 // pred_check_branch
    %11 = sbr.rel (0) target = $region9
  $region8: #{decoder_rnn_forward.4} parent=0 // pred_region
    _
  $region9: #{decoder_rnn_forward.4} parent=0 // pred_fallthru
    _
  // Predicated region
  $region10: #{decoder_rnn_forward.4} parent=0 // pred_check
    _
  $region11: #{decoder_rnn_forward.4} parent=0 // pred_check_branch
    %13 = sbr.rel (0) target = $region13
  $region12: #{decoder_rnn_forward.4} parent=0 // pred_region
    _
  $region13: #{decoder_rnn_forward.4} parent=0 // pred_fallthru
    _
  %14 = vst [vmem:[#allocation2] sm:$0xff] 0.0
  %v15 = vld [vmem:[%s2] sm:$0x7]
  %v16 = vld [vmem:[%s1] sm:$0xff]
  %v17 = vld [vmem:[%s1 + $0x8] sm:$0xf]
  %v18 = vld [vmem:[%s1 + $0xc] sm:$0xff]
  %v19 = vld [vmem:[%s1 + $0x14] sm:$0xf]
  %v20 = vld [vmem:[%s1 + $0x18] sm:$0xff]
  %v21 = vld [vmem:[%s1 + $0x20] sm:$0xf]
  %v22 = vld [vmem:[%s1 + $0x24] sm:$0xff]
  %v23 = vld [vmem:[%s1 + $0x2c] sm:$0xf]
  %v24 = vld [vmem:[%s1 + $0x30] sm:$0xff]
  %v25 = vld [vmem:[%s1 + $0x38] sm:$0xf]
  %v26 = vld [vmem:[%s1 + $0x3c] sm:$0xff]
  %v27 = vld [vmem:[%s1 + $0x44] sm:$0xf]
  %v28 = vld [vmem:[%s1 + $0x48] sm:$0xff]
  %v29 = vld [vmem:[%s1 + $0x50] sm:$0xf]
  %v30 = vld [vmem:[%s1 + $0x54] sm:$0xff]
  %v31 = vld [vmem:[%s1 + $0x5c] sm:$0xf]
  %v32 = vld [vmem:[%s1 + $0x60] sm:$0xff]
  %v33 = vld [vmem:[%s1 + $0x68] sm:$0xf]
  %v34 = vld [vmem:[%s1 + $0x6c] sm:$0xff]
  %v35 = vld [vmem:[%s1 + $0x74] sm:$0xf]
  %v36 = vld [vmem:[%s1 + $0x78] sm:$0xff]
  %v37 = vld [vmem:[%s1 + $0x80] sm:$0xf]
  %v38 = vld [vmem:[%s1 + $0x84] sm:$0xff]
  %v39 = vld [vmem:[%s1 + $0x8c] sm:$0xf]
  %v40 = vld [vmem:[%s1 + $0x90] sm:$0xff]
  %v41 = vld [vmem:[%s1 + $0x98] sm:$0xf]
  %v42 = vld [vmem:[%s1 + $0x9c] sm:$0xff]
  %v43 = vld [vmem:[%s1 + $0xa4] sm:$0xf]
  %v44 = vld [vmem:[%s1 + $0xa8] sm:$0xff]
  %v45 = vld [vmem:[%s1 + $0xb0] sm:$0xf]
  %v46 = vld [vmem:[%s1 + $0xb4] sm:$0xff]
  %v47 = vld [vmem:[%s1 + $0xbc] sm:$0xf]
  %v48 = vld [vmem:[#allocation2] sm:$0xff]
  %v49 = vld [vmem:[%s0] sm:$0xff]
  %v50 = vld [vmem:[%s0 + $0x8] sm:$0xff]
  %v51 = vld [vmem:[%s0 + $0x10] sm:$0xff]
  %v52 = vpack.c.bf16 %v48, %v48
  %v54 = vperm.slane %v15, 0
  %v55 = vperm.slane %v15, 1
  %v56 = vperm.slane %v15, 2
  %v92 = vunpack.c.l.b16 %v16
  %v93 = vunpack.c.h.b16 %v16
  %v94 = vunpack.c.l.b16 %v17
  %v95 = vunpack.c.l.b16 %v18
  %v96 = vunpack.c.h.b16 %v18
  %v97 = vunpack.c.l.b16 %v19
  %v98 = vunpack.c.l.b16 %v20
  %v99 = vunpack.c.h.b16 %v20
  %v100 = vunpack.c.l.b16 %v21
  %v101 = vunpack.c.l.b16 %v22
  %v102 = vunpack.c.h.b16 %v22
  %v103 = vunpack.c.l.b16 %v23
  %v104 = vunpack.c.l.b16 %v24
  %v105 = vunpack.c.h.b16 %v24
  %v106 = vunpack.c.l.b16 %v25
  %v107 = vunpack.c.l.b16 %v26
  %v108 = vunpack.c.h.b16 %v26
  %v109 = vunpack.c.l.b16 %v27
  %v110 = vunpack.c.l.b16 %v28
  %v111 = vunpack.c.h.b16 %v28
  %v112 = vunpack.c.l.b16 %v29
  %v113 = vunpack.c.l.b16 %v30
  %v114 = vunpack.c.h.b16 %v30
  %v115 = vunpack.c.l.b16 %v31
  %v116 = vunpack.c.l.b16 %v32
  %v117 = vunpack.c.h.b16 %v32
  %v118 = vunpack.c.l.b16 %v33
  %v119 = vunpack.c.l.b16 %v34
  %v120 = vunpack.c.h.b16 %v34
  %v121 = vunpack.c.l.b16 %v35
  %v122 = vunpack.c.l.b16 %v36
  %v123 = vunpack.c.h.b16 %v36
  %v124 = vunpack.c.l.b16 %v37
  %v125 = vunpack.c.l.b16 %v38
  %v126 = vunpack.c.h.b16 %v38
  %v127 = vunpack.c.l.b16 %v39
  %v128 = vunpack.c.l.b16 %v40
  %v129 = vunpack.c.h.b16 %v40
  %v130 = vunpack.c.l.b16 %v41
  %v131 = vunpack.c.l.b16 %v42
  %v132 = vunpack.c.h.b16 %v42
  %v133 = vunpack.c.l.b16 %v43
  %v134 = vunpack.c.l.b16 %v44
  %v135 = vunpack.c.h.b16 %v44
  %v136 = vunpack.c.l.b16 %v45
  %v137 = vunpack.c.l.b16 %v46
  %v138 = vunpack.c.h.b16 %v46
  %v139 = vunpack.c.l.b16 %v47
  %v140 = vpack.c.b16 %v95, %v92
  %v141 = vpack.c.b16 %v96, %v93
  %v142 = vpack.c.b16 %v97, %v94
  %v143 = vpack.c.b16 %v101, %v98
  %v144 = vpack.c.b16 %v102, %v99
  %v145 = vpack.c.b16 %v103, %v100
  %v146 = vpack.c.b16 %v107, %v104
  %v147 = vpack.c.b16 %v108, %v105
  %v148 = vpack.c.b16 %v109, %v106
  %v149 = vpack.c.b16 %v113, %v110
  %v150 = vpack.c.b16 %v114, %v111
  %v151 = vpack.c.b16 %v115, %v112
  %v152 = vpack.c.b16 %v119, %v116
  %v153 = vpack.c.b16 %v120, %v117
  %v154 = vpack.c.b16 %v121, %v118
  %v155 = vpack.c.b16 %v125, %v122
  %v156 = vpack.c.b16 %v126, %v123
  %v157 = vpack.c.b16 %v127, %v124
  %v158 = vpack.c.b16 %v131, %v128
  %v159 = vpack.c.b16 %v132, %v129
  %v160 = vpack.c.b16 %v133, %v130
  %v161 = vpack.c.b16 %v137, %v134
  %v162 = vpack.c.b16 %v138, %v135
  %v163 = vpack.c.b16 %v139, %v136
  %188 = vmatpush.bf16.msra.mxu0 %v161
  %189 = vmatpush.bf16.msra.mxu0 %v158
  %190 = vmatpush.bf16.msra.mxu0 %v155
  %191 = vmatpush.bf16.msra.mxu0 %v152
  %192 = vmatpush.bf16.msra.mxu0 %v149
  %193 = vmatpush.bf16.msra.mxu0 %v146
  %194 = vmatpush.bf16.msra.mxu0 %v143
  %195 = vmatpush.bf16.msra.mxu0 %v140
  %196 = vmatmul.bf16.gmra.mxu0 %v52
  %v197 = vpop.f32.mrf.mxu0
  %v198 = vadd.f32 %v54, %v197
  %v199 = vpop.f32.mrf.mxu0
  %200 = vdwg.mxu0
  %201 = vmatpush.bf16.msra.mxu0 %v162
  %202 = vmatpush.bf16.msra.mxu0 %v159
  %203 = vmatpush.bf16.msra.mxu0 %v156
  %204 = vmatpush.bf16.msra.mxu0 %v153
  %205 = vmatpush.bf16.msra.mxu0 %v150
  %206 = vmatpush.bf16.msra.mxu0 %v147
  %207 = vmatpush.bf16.msra.mxu0 %v144
  %208 = vmatpush.bf16.msra.mxu0 %v141
  %209 = vmatmul.bf16.gmra.mxu0 %v52
  %v210 = vpop.f32.mrf.mxu0
  %v211 = vadd.f32 %v55, %v210
  %v212 = vpop.f32.mrf.mxu0
  %213 = vdwg.mxu0
  %214 = vmatpush.bf16.msra.mxu0 %v163
  %215 = vmatpush.bf16.msra.mxu0 %v160
  %216 = vmatpush.bf16.msra.mxu0 %v157
  %217 = vmatpush.bf16.msra.mxu0 %v154
  %218 = vmatpush.bf16.msra.mxu0 %v151
  %219 = vmatpush.bf16.msra.mxu0 %v148
  %220 = vmatpush.bf16.msra.mxu0 %v145
  %221 = vmatpush.bf16.msra.mxu0 %v142
  %222 = vmatmul.bf16.gmra.mxu0 %v52
  %v223 = vpop.f32.mrf.mxu0
  %v224 = vadd.f32 %v56, %v223
  %v225 = vpop.f32.mrf.mxu0
  %226 = vdwg.mxu0
  %v227 = vadd.f32 %v49, %v198
  %v228 = vxor.u32 %v227, 2147483648
  %v229 = vmul.f32 %v228, 1.442695
  %v230 = vpow.pop %v229
  %v231 = vadd.f32 %v230, 1.0
  %v232 = vrcp.pop %v231
  %v233 = vmul.f32 %v231, %v232
  %v234 = vsub.f32 1.0, %v233
  %v235 = vmul.f32 %v232, %v234
  %v236 = vadd.f32 %v232, %v235
  %vm237 = vweird.f32 %v231
  %vm238 = vweird.f32 %v232
  %vm239 = vmor %vm237, %vm238
  %v240 = vsel %vm239, %v232, %v236
  %v241 = vand.u32 2147483647, %v231
  %vm242 = vcmp.eq.f32.partialorder %v241, 8.507059e+37
  %v243 = vand.u32 %v231, 2147483648
  %v244 = vor.u32 1.1754944e-38, %v243
  %v245 = vsel %vm242, %v244, %v240
  %v246 = vmul.f32 1.0, %v245
  %v247 = vadd.f32 %v50, %v211
  %v248 = vxor.u32 %v247, 2147483648
  %v249 = vmul.f32 %v248, 1.442695
  %v250 = vpow.pop %v249
  %v251 = vadd.f32 %v250, 1.0
  %v252 = vrcp.pop %v251
  %v253 = vmul.f32 %v251, %v252
  %v254 = vsub.f32 1.0, %v253
  %v255 = vmul.f32 %v252, %v254
  %v256 = vadd.f32 %v252, %v255
  %vm257 = vweird.f32 %v251
  %vm258 = vweird.f32 %v252
  %vm259 = vmor %vm257, %vm258
  %v260 = vsel %vm259, %v252, %v256
  %v261 = vand.u32 2147483647, %v251
  %vm262 = vcmp.eq.f32.partialorder %v261, 8.507059e+37
  %v263 = vand.u32 %v251, 2147483648
  %v264 = vor.u32 1.1754944e-38, %v263
  %v265 = vsel %vm262, %v264, %v260
  %v266 = vmul.f32 1.0, %v265
  %v267 = vmul.f32 %v246, %v224
  %v268 = vadd.f32 %v51, %v267
  %v269 = vtanh.pop %v268
  %v270 = vsub.f32 1.0, %v266
  %v271 = vmul.f32 %v270, %v269
  %v272 = vmul.f32 %v266, %v48
  %v273 = vadd.f32 %v271, %v272
  %274 = vst [vmem:[#allocation2] sm:$0xff] %v273
  %275 = vst [vmem:[%s3] sm:$0xff] %v273
  %v276 = vld [vmem:[#allocation2] sm:$0xff]
  %s277 = scalar_lea.vmem %s0, 24
  %v278 = vld [vmem:[%s277] sm:$0xff]
  %v279 = vld [vmem:[%s277 + $0x8] sm:$0xff]
  %v280 = vld [vmem:[%s277 + $0x10] sm:$0xff]
  %v281 = vpack.c.bf16 %v276, %v276
  %282 = vmatpush.bf16.msra.mxu0 %v161
  %283 = vmatpush.bf16.msra.mxu0 %v158
  %284 = vmatpush.bf16.msra.mxu0 %v155
  %285 = vmatpush.bf16.msra.mxu0 %v152
  %286 = vmatpush.bf16.msra.mxu0 %v149
  %287 = vmatpush.bf16.msra.mxu0 %v146
  %288 = vmatpush.bf16.msra.mxu0 %v143
  %289 = vmatpush.bf16.msra.mxu0 %v140
  %290 = vmatmul.bf16.gmra.mxu0 %v281
  %v291 = vpop.f32.mrf.mxu0
  %v292 = vadd.f32 %v54, %v291
  %v293 = vpop.f32.mrf.mxu0
  %294 = vdwg.mxu0
  %295 = vmatpush.bf16.msra.mxu0 %v162
  %296 = vmatpush.bf16.msra.mxu0 %v159
  %297 = vmatpush.bf16.msra.mxu0 %v156
  %298 = vmatpush.bf16.msra.mxu0 %v153
  %299 = vmatpush.bf16.msra.mxu0 %v150
  %300 = vmatpush.bf16.msra.mxu0 %v147
  %301 = vmatpush.bf16.msra.mxu0 %v144
  %302 = vmatpush.bf16.msra.mxu0 %v141
  %303 = vmatmul.bf16.gmra.mxu0 %v281
  %v304 = vpop.f32.mrf.mxu0
  %v305 = vadd.f32 %v55, %v304
  %v306 = vpop.f32.mrf.mxu0
  %307 = vdwg.mxu0
  %308 = vmatpush.bf16.msra.mxu0 %v163
  %309 = vmatpush.bf16.msra.mxu0 %v160
  %310 = vmatpush.bf16.msra.mxu0 %v157
  %311 = vmatpush.bf16.msra.mxu0 %v154
  %312 = vmatpush.bf16.msra.mxu0 %v151
  %313 = vmatpush.bf16.msra.mxu0 %v148
  %314 = vmatpush.bf16.msra.mxu0 %v145
  %315 = vmatpush.bf16.msra.mxu0 %v142
  %316 = vmatmul.bf16.gmra.mxu0 %v281
  %v317 = vpop.f32.mrf.mxu0
  %v318 = vadd.f32 %v56, %v317
  %v319 = vpop.f32.mrf.mxu0
  %320 = vdwg.mxu0
  %v321 = vadd.f32 %v278, %v292
  %v322 = vxor.u32 %v321, 2147483648
  %v323 = vmul.f32 %v322, 1.442695
  %v324 = vpow.pop %v323
  %v325 = vadd.f32 %v324, 1.0
  %v326 = vrcp.pop %v325
  %v327 = vmul.f32 %v325, %v326
  %v328 = vsub.f32 1.0, %v327
  %v329 = vmul.f32 %v326, %v328
  %v330 = vadd.f32 %v326, %v329
  %vm331 = vweird.f32 %v325
  %vm332 = vweird.f32 %v326
  %vm333 = vmor %vm331, %vm332
  %v334 = vsel %vm333, %v326, %v330
  %v335 = vand.u32 2147483647, %v325
  %vm336 = vcmp.eq.f32.partialorder %v335, 8.507059e+37
  %v337 = vand.u32 %v325, 2147483648
  %v338 = vor.u32 1.1754944e-38, %v337
  %v339 = vsel %vm336, %v338, %v334
  %v340 = vmul.f32 1.0, %v339
  %v341 = vadd.f32 %v279, %v305
  %v342 = vxor.u32 %v341, 2147483648
  %v343 = vmul.f32 %v342, 1.442695
  %v344 = vpow.pop %v343
  %v345 = vadd.f32 %v344, 1.0
  %v346 = vrcp.pop %v345
  %v347 = vmul.f32 %v345, %v346
  %v348 = vsub.f32 1.0, %v347
  %v349 = vmul.f32 %v346, %v348
  %v350 = vadd.f32 %v346, %v349
  %vm351 = vweird.f32 %v345
  %vm352 = vweird.f32 %v346
  %vm353 = vmor %vm351, %vm352
  %v354 = vsel %vm353, %v346, %v350
  %v355 = vand.u32 2147483647, %v345
  %vm356 = vcmp.eq.f32.partialorder %v355, 8.507059e+37
  %v357 = vand.u32 %v345, 2147483648
  %v358 = vor.u32 1.1754944e-38, %v357
  %v359 = vsel %vm356, %v358, %v354
  %v360 = vmul.f32 1.0, %v359
  %v361 = vmul.f32 %v340, %v318
  %v362 = vadd.f32 %v280, %v361
  %v363 = vtanh.pop %v362
  %v364 = vsub.f32 1.0, %v360
  %v365 = vmul.f32 %v364, %v363
  %v366 = vmul.f32 %v360, %v276
  %v367 = vadd.f32 %v365, %v366
  %368 = vst [vmem:[#allocation2] sm:$0xff] %v367
  %s369 = scalar_lea.vmem %s3, 8
  %370 = vst [vmem:[%s369] sm:$0xff] %v367
  %v371 = vld [vmem:[#allocation2] sm:$0xff]
  %s372 = scalar_lea.vmem %s0, 48
  %v373 = vld [vmem:[%s372] sm:$0xff]
  %v374 = vld [vmem:[%s372 + $0x8] sm:$0xff]
  %v375 = vld [vmem:[%s372 + $0x10] sm:$0xff]
  %v376 = vpack.c.bf16 %v371, %v371
  %377 = vmatpush.bf16.msra.mxu0 %v161
  %378 = vmatpush.bf16.msra.mxu0 %v158
  %379 = vmatpush.bf16.msra.mxu0 %v155
  %380 = vmatpush.bf16.msra.mxu0 %v152
  %381 = vmatpush.bf16.msra.mxu0 %v149
  %382 = vmatpush.bf16.msra.mxu0 %v146
  %383 = vmatpush.bf16.msra.mxu0 %v143
  %384 = vmatpush.bf16.msra.mxu0 %v140
  %385 = vmatmul.bf16.gmra.mxu0 %v376
  %v386 = vpop.f32.mrf.mxu0
  %v387 = vadd.f32 %v54, %v386
  %v388 = vpop.f32.mrf.mxu0
  %389 = vdwg.mxu0
  %390 = vmatpush.bf16.msra.mxu0 %v162
  %391 = vmatpush.bf16.msra.mxu0 %v159
  %392 = vmatpush.bf16.msra.mxu0 %v156
  %393 = vmatpush.bf16.msra.mxu0 %v153
  %394 = vmatpush.bf16.msra.mxu0 %v150
  %395 = vmatpush.bf16.msra.mxu0 %v147
  %396 = vmatpush.bf16.msra.mxu0 %v144
  %397 = vmatpush.bf16.msra.mxu0 %v141
  %398 = vmatmul.bf16.gmra.mxu0 %v376
  %v399 = vpop.f32.mrf.mxu0
  %v400 = vadd.f32 %v55, %v399
  %v401 = vpop.f32.mrf.mxu0
  %402 = vdwg.mxu0
  %403 = vmatpush.bf16.msra.mxu0 %v163
  %404 = vmatpush.bf16.msra.mxu0 %v160
  %405 = vmatpush.bf16.msra.mxu0 %v157
  %406 = vmatpush.bf16.msra.mxu0 %v154
  %407 = vmatpush.bf16.msra.mxu0 %v151
  %408 = vmatpush.bf16.msra.mxu0 %v148
  %409 = vmatpush.bf16.msra.mxu0 %v145
  %410 = vmatpush.bf16.msra.mxu0 %v142
  %411 = vmatmul.bf16.gmra.mxu0 %v376
  %v412 = vpop.f32.mrf.mxu0
  %v413 = vadd.f32 %v56, %v412
  %v414 = vpop.f32.mrf.mxu0
  %415 = vdwg.mxu0
  %v416 = vadd.f32 %v373, %v387
  %v417 = vxor.u32 %v416, 2147483648
  %v418 = vmul.f32 %v417, 1.442695
  %v419 = vpow.pop %v418
  %v420 = vadd.f32 %v419, 1.0
  %v421 = vrcp.pop %v420
  %v422 = vmul.f32 %v420, %v421
  %v423 = vsub.f32 1.0, %v422
  %v424 = vmul.f32 %v421, %v423
  %v425 = vadd.f32 %v421, %v424
  %vm426 = vweird.f32 %v420
  %vm427 = vweird.f32 %v421
  %vm428 = vmor %vm426, %vm427
  %v429 = vsel %vm428, %v421, %v425
  %v430 = vand.u32 2147483647, %v420
  %vm431 = vcmp.eq.f32.partialorder %v430, 8.507059e+37
  %v432 = vand.u32 %v420, 2147483648
  %v433 = vor.u32 1.1754944e-38, %v432
  %v434 = vsel %vm431, %v433, %v429
  %v435 = vmul.f32 1.0, %v434
  %v436 = vadd.f32 %v374, %v400
  %v437 = vxor.u32 %v436, 2147483648
  %v438 = vmul.f32 %v437, 1.442695
  %v439 = vpow.pop %v438
  %v440 = vadd.f32 %v439, 1.0
  %v441 = vrcp.pop %v440
  %v442 = vmul.f32 %v440, %v441
  %v443 = vsub.f32 1.0, %v442
  %v444 = vmul.f32 %v441, %v443
  %v445 = vadd.f32 %v441, %v444
  %vm446 = vweird.f32 %v440
  %vm447 = vweird.f32 %v441
  %vm448 = vmor %vm446, %vm447
  %v449 = vsel %vm448, %v441, %v445
  %v450 = vand.u32 2147483647, %v440
  %vm451 = vcmp.eq.f32.partialorder %v450, 8.507059e+37
  %v452 = vand.u32 %v440, 2147483648
  %v453 = vor.u32 1.1754944e-38, %v452
  %v454 = vsel %vm451, %v453, %v449
  %v455 = vmul.f32 1.0, %v454
  %v456 = vmul.f32 %v435, %v413
  %v457 = vadd.f32 %v375, %v456
  %v458 = vtanh.pop %v457
  %v459 = vsub.f32 1.0, %v455
  %v460 = vmul.f32 %v459, %v458
  %v461 = vmul.f32 %v455, %v371
  %v462 = vadd.f32 %v460, %v461
  %463 = vst [vmem:[#allocation2] sm:$0xff] %v462
  %s464 = scalar_lea.vmem %s3, 16
  %465 = vst [vmem:[%s464] sm:$0xff] %v462
  %v466 = vld [vmem:[#allocation2] sm:$0xff]
  %s467 = scalar_lea.vmem %s0, 72
  %v468 = vld [vmem:[%s467] sm:$0xff]
  %v469 = vld [vmem:[%s467 + $0x8] sm:$0xff]
  %v470 = vld [vmem:[%s467 + $0x10] sm:$0xff]
  %v471 = vpack.c.bf16 %v466, %v466
  %472 = vmatpush.bf16.msra.mxu0 %v161
  %473 = vmatpush.bf16.msra.mxu0 %v158
  %474 = vmatpush.bf16.msra.mxu0 %v155
  %475 = vmatpush.bf16.msra.mxu0 %v152
  %476 = vmatpush.bf16.msra.mxu0 %v149
  %477 = vmatpush.bf16.msra.mxu0 %v146
  %478 = vmatpush.bf16.msra.mxu0 %v143
  %479 = vmatpush.bf16.msra.mxu0 %v140
  %480 = vmatmul.bf16.gmra.mxu0 %v471
  %v481 = vpop.f32.mrf.mxu0
  %v482 = vadd.f32 %v54, %v481
  %v483 = vpop.f32.mrf.mxu0
  %484 = vdwg.mxu0
  %485 = vmatpush.bf16.msra.mxu0 %v162
  %486 = vmatpush.bf16.msra.mxu0 %v159
  %487 = vmatpush.bf16.msra.mxu0 %v156
  %488 = vmatpush.bf16.msra.mxu0 %v153
  %489 = vmatpush.bf16.msra.mxu0 %v150
  %490 = vmatpush.bf16.msra.mxu0 %v147
  %491 = vmatpush.bf16.msra.mxu0 %v144
  %492 = vmatpush.bf16.msra.mxu0 %v141
  %493 = vmatmul.bf16.gmra.mxu0 %v471
  %v494 = vpop.f32.mrf.mxu0
  %v495 = vadd.f32 %v55, %v494
  %v496 = vpop.f32.mrf.mxu0
  %497 = vdwg.mxu0
  %498 = vmatpush.bf16.msra.mxu0 %v163
  %499 = vmatpush.bf16.msra.mxu0 %v160
  %500 = vmatpush.bf16.msra.mxu0 %v157
  %501 = vmatpush.bf16.msra.mxu0 %v154
  %502 = vmatpush.bf16.msra.mxu0 %v151
  %503 = vmatpush.bf16.msra.mxu0 %v148
  %504 = vmatpush.bf16.msra.mxu0 %v145
  %505 = vmatpush.bf16.msra.mxu0 %v142
  %506 = vmatmul.bf16.gmra.mxu0 %v471
  %v507 = vpop.f32.mrf.mxu0
  %v508 = vadd.f32 %v56, %v507
  %v509 = vpop.f32.mrf.mxu0
  %510 = vdwg.mxu0
  %v511 = vadd.f32 %v468, %v482
  %v512 = vxor.u32 %v511, 2147483648
  %v513 = vmul.f32 %v512, 1.442695
  %v514 = vpow.pop %v513
  %v515 = vadd.f32 %v514, 1.0
  %v516 = vrcp.pop %v515
  %v517 = vmul.f32 %v515, %v516
  %v518 = vsub.f32 1.0, %v517
  %v519 = vmul.f32 %v516, %v518
  %v520 = vadd.f32 %v516, %v519
  %vm521 = vweird.f32 %v515
  %vm522 = vweird.f32 %v516
  %vm523 = vmor %vm521, %vm522
  %v524 = vsel %vm523, %v516, %v520
  %v525 = vand.u32 2147483647, %v515
  %vm526 = vcmp.eq.f32.partialorder %v525, 8.507059e+37
  %v527 = vand.u32 %v515, 2147483648
  %v528 = vor.u32 1.1754944e-38, %v527
  %v529 = vsel %vm526, %v528, %v524
  %v530 = vmul.f32 1.0, %v529
  %v531 = vadd.f32 %v469, %v495
  %v532 = vxor.u32 %v531, 2147483648
  %v533 = vmul.f32 %v532, 1.442695
  %v534 = vpow.pop %v533
  %v535 = vadd.f32 %v534, 1.0
  %v536 = vrcp.pop %v535
  %v537 = vmul.f32 %v535, %v536
  %v538 = vsub.f32 1.0, %v537
  %v539 = vmul.f32 %v536, %v538
  %v540 = vadd.f32 %v536, %v539
  %vm541 = vweird.f32 %v535
  %vm542 = vweird.f32 %v536
  %vm543 = vmor %vm541, %vm542
  %v544 = vsel %vm543, %v536, %v540
  %v545 = vand.u32 2147483647, %v535
  %vm546 = vcmp.eq.f32.partialorder %v545, 8.507059e+37
  %v547 = vand.u32 %v535, 2147483648
  %v548 = vor.u32 1.1754944e-38, %v547
  %v549 = vsel %vm546, %v548, %v544
  %v550 = vmul.f32 1.0, %v549
  %v551 = vmul.f32 %v530, %v508
  %v552 = vadd.f32 %v470, %v551
  %v553 = vtanh.pop %v552
  %v554 = vsub.f32 1.0, %v550
  %v555 = vmul.f32 %v554, %v553
  %v556 = vmul.f32 %v550, %v466
  %v557 = vadd.f32 %v555, %v556
  %558 = vst [vmem:[#allocation2] sm:$0xff] %v557
  %s559 = scalar_lea.vmem %s3, 24
  %560 = vst [vmem:[%s559] sm:$0xff] %v557
  %v561 = vld [vmem:[#allocation2] sm:$0xff]
  %s562 = scalar_lea.vmem %s0, 96
  %v563 = vld [vmem:[%s562] sm:$0xff]
  %v564 = vld [vmem:[%s562 + $0x8] sm:$0xff]
  %v565 = vld [vmem:[%s562 + $0x10] sm:$0xff]
  %v566 = vpack.c.bf16 %v561, %v561
  %567 = vmatpush.bf16.msra.mxu0 %v161
  %568 = vmatpush.bf16.msra.mxu0 %v158
  %569 = vmatpush.bf16.msra.mxu0 %v155
  %570 = vmatpush.bf16.msra.mxu0 %v152
  %571 = vmatpush.bf16.msra.mxu0 %v149
  %572 = vmatpush.bf16.msra.mxu0 %v146
  %573 = vmatpush.bf16.msra.mxu0 %v143
  %574 = vmatpush.bf16.msra.mxu0 %v140
  %575 = vmatmul.bf16.gmra.mxu0 %v566
  %v576 = vpop.f32.mrf.mxu0
  %v577 = vadd.f32 %v54, %v576
  %v578 = vpop.f32.mrf.mxu0
  %579 = vdwg.mxu0
  %580 = vmatpush.bf16.msra.mxu0 %v162
  %581 = vmatpush.bf16.msra.mxu0 %v159
  %582 = vmatpush.bf16.msra.mxu0 %v156
  %583 = vmatpush.bf16.msra.mxu0 %v153
  %584 = vmatpush.bf16.msra.mxu0 %v150
  %585 = vmatpush.bf16.msra.mxu0 %v147
  %586 = vmatpush.bf16.msra.mxu0 %v144
  %587 = vmatpush.bf16.msra.mxu0 %v141
  %588 = vmatmul.bf16.gmra.mxu0 %v566
  %v589 = vpop.f32.mrf.mxu0
  %v590 = vadd.f32 %v55, %v589
  %v591 = vpop.f32.mrf.mxu0
  %592 = vdwg.mxu0
  %593 = vmatpush.bf16.msra.mxu0 %v163
  %594 = vmatpush.bf16.msra.mxu0 %v160
  %595 = vmatpush.bf16.msra.mxu0 %v157
  %596 = vmatpush.bf16.msra.mxu0 %v154
  %597 = vmatpush.bf16.msra.mxu0 %v151
  %598 = vmatpush.bf16.msra.mxu0 %v148
  %599 = vmatpush.bf16.msra.mxu0 %v145
  %600 = vmatpush.bf16.msra.mxu0 %v142
  %601 = vmatmul.bf16.gmra.mxu0 %v566
  %v602 = vpop.f32.mrf.mxu0
  %v603 = vadd.f32 %v56, %v602
  %v604 = vpop.f32.mrf.mxu0
  %605 = vdwg.mxu0
  %v606 = vadd.f32 %v563, %v577
  %v607 = vxor.u32 %v606, 2147483648
  %v608 = vmul.f32 %v607, 1.442695
  %v609 = vpow.pop %v608
  %v610 = vadd.f32 %v609, 1.0
  %v611 = vrcp.pop %v610
  %v612 = vmul.f32 %v610, %v611
  %v613 = vsub.f32 1.0, %v612
  %v614 = vmul.f32 %v611, %v613
  %v615 = vadd.f32 %v611, %v614
  %vm616 = vweird.f32 %v610
  %vm617 = vweird.f32 %v611
  %vm618 = vmor %vm616, %vm617
  %v619 = vsel %vm618, %v611, %v615
  %v620 = vand.u32 2147483647, %v610
  %vm621 = vcmp.eq.f32.partialorder %v620, 8.507059e+37
  %v622 = vand.u32 %v610, 2147483648
  %v623 = vor.u32 1.1754944e-38, %v622
  %v624 = vsel %vm621, %v623, %v619
  %v625 = vmul.f32 1.0, %v624
  %v626 = vadd.f32 %v564, %v590
  %v627 = vxor.u32 %v626, 2147483648
  %v628 = vmul.f32 %v627, 1.442695
  %v629 = vpow.pop %v628
  %v630 = vadd.f32 %v629, 1.0
  %v631 = vrcp.pop %v630
  %v632 = vmul.f32 %v630, %v631
  %v633 = vsub.f32 1.0, %v632
  %v634 = vmul.f32 %v631, %v633
  %v635 = vadd.f32 %v631, %v634
  %vm636 = vweird.f32 %v630
  %vm637 = vweird.f32 %v631
  %vm638 = vmor %vm636, %vm637
  %v639 = vsel %vm638, %v631, %v635
  %v640 = vand.u32 2147483647, %v630
  %vm641 = vcmp.eq.f32.partialorder %v640, 8.507059e+37
  %v642 = vand.u32 %v630, 2147483648
  %v643 = vor.u32 1.1754944e-38, %v642
  %v644 = vsel %vm641, %v643, %v639
  %v645 = vmul.f32 1.0, %v644
  %v646 = vmul.f32 %v625, %v603
  %v647 = vadd.f32 %v565, %v646
  %v648 = vtanh.pop %v647
  %v649 = vsub.f32 1.0, %v645
  %v650 = vmul.f32 %v649, %v648
  %v651 = vmul.f32 %v645, %v561
  %v652 = vadd.f32 %v650, %v651
  %653 = vst [vmem:[#allocation2] sm:$0xff] %v652
  %s654 = scalar_lea.vmem %s3, 32
  %655 = vst [vmem:[%s654] sm:$0xff] %v652
  %v656 = vld [vmem:[#allocation2] sm:$0xff]
  %s657 = scalar_lea.vmem %s0, 120
  %v658 = vld [vmem:[%s657] sm:$0xff]
  %v659 = vld [vmem:[%s657 + $0x8] sm:$0xff]
  %v660 = vld [vmem:[%s657 + $0x10] sm:$0xff]
  %v661 = vpack.c.bf16 %v656, %v656
  %662 = vmatpush.bf16.msra.mxu0 %v161
  %663 = vmatpush.bf16.msra.mxu0 %v158
  %664 = vmatpush.bf16.msra.mxu0 %v155
  %665 = vmatpush.bf16.msra.mxu0 %v152
  %666 = vmatpush.bf16.msra.mxu0 %v149
  %667 = vmatpush.bf16.msra.mxu0 %v146
  %668 = vmatpush.bf16.msra.mxu0 %v143
  %669 = vmatpush.bf16.msra.mxu0 %v140
  %670 = vmatmul.bf16.gmra.mxu0 %v661
  %v671 = vpop.f32.mrf.mxu0
  %v672 = vadd.f32 %v54, %v671
  %v673 = vpop.f32.mrf.mxu0
  %674 = vdwg.mxu0
  %675 = vmatpush.bf16.msra.mxu0 %v162
  %676 = vmatpush.bf16.msra.mxu0 %v159
  %677 = vmatpush.bf16.msra.mxu0 %v156
  %678 = vmatpush.bf16.msra.mxu0 %v153
  %679 = vmatpush.bf16.msra.mxu0 %v150
  %680 = vmatpush.bf16.msra.mxu0 %v147
  %681 = vmatpush.bf16.msra.mxu0 %v144
  %682 = vmatpush.bf16.msra.mxu0 %v141
  %683 = vmatmul.bf16.gmra.mxu0 %v661
  %v684 = vpop.f32.mrf.mxu0
  %v685 = vadd.f32 %v55, %v684
  %v686 = vpop.f32.mrf.mxu0
  %687 = vdwg.mxu0
  %688 = vmatpush.bf16.msra.mxu0 %v163
  %689 = vmatpush.bf16.msra.mxu0 %v160
  %690 = vmatpush.bf16.msra.mxu0 %v157
  %691 = vmatpush.bf16.msra.mxu0 %v154
  %692 = vmatpush.bf16.msra.mxu0 %v151
  %693 = vmatpush.bf16.msra.mxu0 %v148
  %694 = vmatpush.bf16.msra.mxu0 %v145
  %695 = vmatpush.bf16.msra.mxu0 %v142
  %696 = vmatmul.bf16.gmra.mxu0 %v661
  %v697 = vpop.f32.mrf.mxu0
  %v698 = vadd.f32 %v56, %v697
  %v699 = vpop.f32.mrf.mxu0
  %700 = vdwg.mxu0
  %v701 = vadd.f32 %v658, %v672
  %v702 = vxor.u32 %v701, 2147483648
  %v703 = vmul.f32 %v702, 1.442695
  %v704 = vpow.pop %v703
  %v705 = vadd.f32 %v704, 1.0
  %v706 = vrcp.pop %v705
  %v707 = vmul.f32 %v705, %v706
  %v708 = vsub.f32 1.0, %v707
  %v709 = vmul.f32 %v706, %v708
  %v710 = vadd.f32 %v706, %v709
  %vm711 = vweird.f32 %v705
  %vm712 = vweird.f32 %v706
  %vm713 = vmor %vm711, %vm712
  %v714 = vsel %vm713, %v706, %v710
  %v715 = vand.u32 2147483647, %v705
  %vm716 = vcmp.eq.f32.partialorder %v715, 8.507059e+37
  %v717 = vand.u32 %v705, 2147483648
  %v718 = vor.u32 1.1754944e-38, %v717
  %v719 = vsel %vm716, %v718, %v714
  %v720 = vmul.f32 1.0, %v719
  %v721 = vadd.f32 %v659, %v685
  %v722 = vxor.u32 %v721, 2147483648
  %v723 = vmul.f32 %v722, 1.442695
  %v724 = vpow.pop %v723
  %v725 = vadd.f32 %v724, 1.0
  %v726 = vrcp.pop %v725
  %v727 = vmul.f32 %v725, %v726
  %v728 = vsub.f32 1.0, %v727
  %v729 = vmul.f32 %v726, %v728
  %v730 = vadd.f32 %v726, %v729
  %vm731 = vweird.f32 %v725
  %vm732 = vweird.f32 %v726
  %vm733 = vmor %vm731, %vm732
  %v734 = vsel %vm733, %v726, %v730
  %v735 = vand.u32 2147483647, %v725
  %vm736 = vcmp.eq.f32.partialorder %v735, 8.507059e+37
  %v737 = vand.u32 %v725, 2147483648
  %v738 = vor.u32 1.1754944e-38, %v737
  %v739 = vsel %vm736, %v738, %v734
  %v740 = vmul.f32 1.0, %v739
  %v741 = vmul.f32 %v720, %v698
  %v742 = vadd.f32 %v660, %v741
  %v743 = vtanh.pop %v742
  %v744 = vsub.f32 1.0, %v740
  %v745 = vmul.f32 %v744, %v743
  %v746 = vmul.f32 %v740, %v656
  %v747 = vadd.f32 %v745, %v746
  %748 = vst [vmem:[#allocation2] sm:$0xff] %v747
  %s749 = scalar_lea.vmem %s3, 40
  %750 = vst [vmem:[%s749] sm:$0xff] %v747
  %v751 = vld [vmem:[#allocation2] sm:$0xff]
  %s752 = scalar_lea.vmem %s0, 144
  %v753 = vld [vmem:[%s752] sm:$0xff]
  %v754 = vld [vmem:[%s752 + $0x8] sm:$0xff]
  %v755 = vld [vmem:[%s752 + $0x10] sm:$0xff]
  %v756 = vpack.c.bf16 %v751, %v751
  %757 = vmatpush.bf16.msra.mxu0 %v161
  %758 = vmatpush.bf16.msra.mxu0 %v158
  %759 = vmatpush.bf16.msra.mxu0 %v155
  %760 = vmatpush.bf16.msra.mxu0 %v152
  %761 = vmatpush.bf16.msra.mxu0 %v149
  %762 = vmatpush.bf16.msra.mxu0 %v146
  %763 = vmatpush.bf16.msra.mxu0 %v143
  %764 = vmatpush.bf16.msra.mxu0 %v140
  %765 = vmatmul.bf16.gmra.mxu0 %v756
  %v766 = vpop.f32.mrf.mxu0
  %v767 = vadd.f32 %v54, %v766
  %v768 = vpop.f32.mrf.mxu0
  %769 = vdwg.mxu0
  %770 = vmatpush.bf16.msra.mxu0 %v162
  %771 = vmatpush.bf16.msra.mxu0 %v159
  %772 = vmatpush.bf16.msra.mxu0 %v156
  %773 = vmatpush.bf16.msra.mxu0 %v153
  %774 = vmatpush.bf16.msra.mxu0 %v150
  %775 = vmatpush.bf16.msra.mxu0 %v147
  %776 = vmatpush.bf16.msra.mxu0 %v144
  %777 = vmatpush.bf16.msra.mxu0 %v141
  %778 = vmatmul.bf16.gmra.mxu0 %v756
  %v779 = vpop.f32.mrf.mxu0
  %v780 = vadd.f32 %v55, %v779
  %v781 = vpop.f32.mrf.mxu0
  %782 = vdwg.mxu0
  %783 = vmatpush.bf16.msra.mxu0 %v163
  %784 = vmatpush.bf16.msra.mxu0 %v160
  %785 = vmatpush.bf16.msra.mxu0 %v157
  %786 = vmatpush.bf16.msra.mxu0 %v154
  %787 = vmatpush.bf16.msra.mxu0 %v151
  %788 = vmatpush.bf16.msra.mxu0 %v148
  %789 = vmatpush.bf16.msra.mxu0 %v145
  %790 = vmatpush.bf16.msra.mxu0 %v142
  %791 = vmatmul.bf16.gmra.mxu0 %v756
  %v792 = vpop.f32.mrf.mxu0
  %v793 = vadd.f32 %v56, %v792
  %v794 = vpop.f32.mrf.mxu0
  %795 = vdwg.mxu0
  %v796 = vadd.f32 %v753, %v767
  %v797 = vxor.u32 %v796, 2147483648
  %v798 = vmul.f32 %v797, 1.442695
  %v799 = vpow.pop %v798
  %v800 = vadd.f32 %v799, 1.0
  %v801 = vrcp.pop %v800
  %v802 = vmul.f32 %v800, %v801
  %v803 = vsub.f32 1.0, %v802
  %v804 = vmul.f32 %v801, %v803
  %v805 = vadd.f32 %v801, %v804
  %vm806 = vweird.f32 %v800
  %vm807 = vweird.f32 %v801
  %vm808 = vmor %vm806, %vm807
  %v809 = vsel %vm808, %v801, %v805
  %v810 = vand.u32 2147483647, %v800
  %vm811 = vcmp.eq.f32.partialorder %v810, 8.507059e+37
  %v812 = vand.u32 %v800, 2147483648
  %v813 = vor.u32 1.1754944e-38, %v812
  %v814 = vsel %vm811, %v813, %v809
  %v815 = vmul.f32 1.0, %v814
  %v816 = vadd.f32 %v754, %v780
  %v817 = vxor.u32 %v816, 2147483648
  %v818 = vmul.f32 %v817, 1.442695
  %v819 = vpow.pop %v818
  %v820 = vadd.f32 %v819, 1.0
  %v821 = vrcp.pop %v820
  %v822 = vmul.f32 %v820, %v821
  %v823 = vsub.f32 1.0, %v822
  %v824 = vmul.f32 %v821, %v823
  %v825 = vadd.f32 %v821, %v824
  %vm826 = vweird.f32 %v820
  %vm827 = vweird.f32 %v821
  %vm828 = vmor %vm826, %vm827
  %v829 = vsel %vm828, %v821, %v825
  %v830 = vand.u32 2147483647, %v820
  %vm831 = vcmp.eq.f32.partialorder %v830, 8.507059e+37
  %v832 = vand.u32 %v820, 2147483648
  %v833 = vor.u32 1.1754944e-38, %v832
  %v834 = vsel %vm831, %v833, %v829
  %v835 = vmul.f32 1.0, %v834
  %v836 = vmul.f32 %v815, %v793
  %v837 = vadd.f32 %v755, %v836
  %v838 = vtanh.pop %v837
  %v839 = vsub.f32 1.0, %v835
  %v840 = vmul.f32 %v839, %v838
  %v841 = vmul.f32 %v835, %v751
  %v842 = vadd.f32 %v840, %v841
  %843 = vst [vmem:[#allocation2] sm:$0xff] %v842
  %s844 = scalar_lea.vmem %s3, 48
  %845 = vst [vmem:[%s844] sm:$0xff] %v842
  %v846 = vld [vmem:[#allocation2] sm:$0xff]
  %s847 = scalar_lea.vmem %s0, 168
  %v848 = vld [vmem:[%s847] sm:$0xff]
  %v849 = vld [vmem:[%s847 + $0x8] sm:$0xff]
  %v850 = vld [vmem:[%s847 + $0x10] sm:$0xff]
  %v851 = vpack.c.bf16 %v846, %v846
  %852 = vmatpush.bf16.msra.mxu0 %v161
  %853 = vmatpush.bf16.msra.mxu0 %v158
  %854 = vmatpush.bf16.msra.mxu0 %v155
  %855 = vmatpush.bf16.msra.mxu0 %v152
  %856 = vmatpush.bf16.msra.mxu0 %v149
  %857 = vmatpush.bf16.msra.mxu0 %v146
  %858 = vmatpush.bf16.msra.mxu0 %v143
  %859 = vmatpush.bf16.msra.mxu0 %v140
  %860 = vmatmul.bf16.gmra.mxu0 %v851
  %v861 = vpop.f32.mrf.mxu0
  %v862 = vadd.f32 %v54, %v861
  %v863 = vpop.f32.mrf.mxu0
  %864 = vdwg.mxu0
  %865 = vmatpush.bf16.msra.mxu0 %v162
  %866 = vmatpush.bf16.msra.mxu0 %v159
  %867 = vmatpush.bf16.msra.mxu0 %v156
  %868 = vmatpush.bf16.msra.mxu0 %v153
  %869 = vmatpush.bf16.msra.mxu0 %v150
  %870 = vmatpush.bf16.msra.mxu0 %v147
  %871 = vmatpush.bf16.msra.mxu0 %v144
  %872 = vmatpush.bf16.msra.mxu0 %v141
  %873 = vmatmul.bf16.gmra.mxu0 %v851
  %v874 = vpop.f32.mrf.mxu0
  %v875 = vadd.f32 %v55, %v874
  %v876 = vpop.f32.mrf.mxu0
  %877 = vdwg.mxu0
  %878 = vmatpush.bf16.msra.mxu0 %v163
  %879 = vmatpush.bf16.msra.mxu0 %v160
  %880 = vmatpush.bf16.msra.mxu0 %v157
  %881 = vmatpush.bf16.msra.mxu0 %v154
  %882 = vmatpush.bf16.msra.mxu0 %v151
  %883 = vmatpush.bf16.msra.mxu0 %v148
  %884 = vmatpush.bf16.msra.mxu0 %v145
  %885 = vmatpush.bf16.msra.mxu0 %v142
  %886 = vmatmul.bf16.gmra.mxu0 %v851
  %v887 = vpop.f32.mrf.mxu0
  %v888 = vadd.f32 %v56, %v887
  %v889 = vpop.f32.mrf.mxu0
  %890 = vdwg.mxu0
  %v891 = vadd.f32 %v848, %v862
  %v892 = vxor.u32 %v891, 2147483648
  %v893 = vmul.f32 %v892, 1.442695
  %v894 = vpow.pop %v893
  %v895 = vadd.f32 %v894, 1.0
  %v896 = vrcp.pop %v895
  %v897 = vmul.f32 %v895, %v896
  %v898 = vsub.f32 1.0, %v897
  %v899 = vmul.f32 %v896, %v898
  %v900 = vadd.f32 %v896, %v899
  %vm901 = vweird.f32 %v895
  %vm902 = vweird.f32 %v896
  %vm903 = vmor %vm901, %vm902
  %v904 = vsel %vm903, %v896, %v900
  %v905 = vand.u32 2147483647, %v895
  %vm906 = vcmp.eq.f32.partialorder %v905, 8.507059e+37
  %v907 = vand.u32 %v895, 2147483648
  %v908 = vor.u32 1.1754944e-38, %v907
  %v909 = vsel %vm906, %v908, %v904
  %v910 = vmul.f32 1.0, %v909
  %v911 = vadd.f32 %v849, %v875
  %v912 = vxor.u32 %v911, 2147483648
  %v913 = vmul.f32 %v912, 1.442695
  %v914 = vpow.pop %v913
  %v915 = vadd.f32 %v914, 1.0
  %v916 = vrcp.pop %v915
  %v917 = vmul.f32 %v915, %v916
  %v918 = vsub.f32 1.0, %v917
  %v919 = vmul.f32 %v916, %v918
  %v920 = vadd.f32 %v916, %v919
  %vm921 = vweird.f32 %v915
  %vm922 = vweird.f32 %v916
  %vm923 = vmor %vm921, %vm922
  %v924 = vsel %vm923, %v916, %v920
  %v925 = vand.u32 2147483647, %v915
  %vm926 = vcmp.eq.f32.partialorder %v925, 8.507059e+37
  %v927 = vand.u32 %v915, 2147483648
  %v928 = vor.u32 1.1754944e-38, %v927
  %v929 = vsel %vm926, %v928, %v924
  %v930 = vmul.f32 1.0, %v929
  %v931 = vmul.f32 %v910, %v888
  %v932 = vadd.f32 %v850, %v931
  %v933 = vtanh.pop %v932
  %v934 = vsub.f32 1.0, %v930
  %v935 = vmul.f32 %v934, %v933
  %v936 = vmul.f32 %v930, %v846
  %v937 = vadd.f32 %v935, %v936
  %938 = vst [vmem:[#allocation2] sm:$0xff] %v937
  %s939 = scalar_lea.vmem %s3, 56
  %940 = vst [vmem:[%s939] sm:$0xff] %v937
  // Predicated region
  $region14: #{decoder_rnn_forward.4} parent=0 // pred_check
    _
  $region15: #{decoder_rnn_forward.4} parent=0 // pred_check_branch
    %942 = sbr.rel (0) target = $region17
  $region16: #{decoder_rnn_forward.4} parent=0 // pred_region
    _
  $region17: #{decoder_rnn_forward.4} parent=0 // pred_fallthru
    _
  // Predicated region
  $region18: #{decoder_rnn_forward.4} parent=0 // pred_check
    _
  $region19: #{decoder_rnn_forward.4} parent=0 // pred_check_branch
    %944 = sbr.rel (0) target = $region21
  $region20: #{decoder_rnn_forward.4} parent=0 // pred_region
    _
  $region21: #{decoder_rnn_forward.4} parent=0 // pred_fallthru
    _

</llo_original>
